<compile_context>
chip_gen: v7x
topology: tpu7x:2x2x1
jax: 0.10.0
libtpu: 0.0.40
codegen_flags: <defaults>
</compile_context>

<pallas_src>
import jax
import jax.numpy as jnp
from jax.experimental import pallas as pl
from jax.experimental.pallas import tpu as pltpu

OUT_PAD = 128  # lane-dense output-head width; real logits live in columns [:output_size]


# ----------------------------------------------------------------------------
# Pallas kernel: fused 5-layer MLP (4 x [bf16 matmul + shift + LeakyReLU] + head)
# ----------------------------------------------------------------------------
def _leaky_relu(h, slope=0.2):
    return jnp.where(h > 0, h, slope * h)


def _mlp_kernel(x_ref, w1_ref, w2_ref, w3_ref, w4_ref, wo_ref, slab_ref, out_ref):
    # slab rows: 0..3 -> per-layer shift (Linear bias + eval-BN folded),
    #            row 4, cols [:OUT_PAD] -> padded output bias.
    # Layer 1 (BN scale already folded into w1 columns)
    h = jnp.dot(x_ref[...], w1_ref[...], preferred_element_type=jnp.float32)
    h = _leaky_relu(h + slab_ref[0:1, :])          # f32 epilogue (v5e VPU has no bf16)
    # dropout1/2/3 -> identity in eval mode

    # Layer 2
    h = jnp.dot(h.astype(jnp.bfloat16), w2_ref[...], preferred_element_type=jnp.float32)
    h = _leaky_relu(h + slab_ref[1:2, :])

    # Layer 3
    h = jnp.dot(h.astype(jnp.bfloat16), w3_ref[...], preferred_element_type=jnp.float32)
    h = _leaky_relu(h + slab_ref[2:3, :])

    # Layer 4
    h = jnp.dot(h.astype(jnp.bfloat16), w4_ref[...], preferred_element_type=jnp.float32)
    h = _leaky_relu(h + slab_ref[3:4, :])

    # Output head (lane-dense, 128-wide padded)
    out = jnp.dot(h.astype(jnp.bfloat16), wo_ref[...], preferred_element_type=jnp.float32)
    out_ref[...] = (out + slab_ref[4:5, 0:OUT_PAD]).astype(out_ref.dtype)


# ----------------------------------------------------------------------------
# Parameter preparation: fold eval-mode BatchNorm1d + bias, pad output head
# ----------------------------------------------------------------------------
def _fold_layer(w, b, gamma, beta, mean, var, eps=1e-5):
    """BN(xW + b) = (x @ (W*scale)) + shift, with scale = gamma/sqrt(var+eps)."""
    scale = gamma / jnp.sqrt(var + eps)
    w_folded = w * scale[None, :]
    shift = (b - mean) * scale + beta
    return w_folded, shift


def prepare_inference_params(params, compute_dtype=jnp.bfloat16):
    hidden = params["w1"].shape[1]
    assert hidden >= OUT_PAD, "hidden size must be >= 128 for the padded output head"
    out_size = params["wo"].shape[1]

    prep = {"out_size": out_size}
    slab = jnp.zeros((8, hidden), jnp.float32)
    for i in range(1, 5):
        w_f, sh = _fold_layer(params[f"w{i}"], params[f"b{i}"], params[f"g{i}"],
                              params[f"be{i}"], params[f"m{i}"], params[f"v{i}"])
        prep[f"w{i}"] = w_f.astype(compute_dtype)
        slab = slab.at[i - 1, :].set(sh)

    # Lane-dense padded output head: (hidden, 128) weights, bias in slab row 4.
    wo_pad = jnp.zeros((hidden, OUT_PAD), jnp.float32).at[:, :out_size].set(params["wo"])
    prep["wo"] = wo_pad.astype(compute_dtype)
    slab = slab.at[4, :out_size].set(params["bo"])
    prep["slab"] = slab
    return prep


# ----------------------------------------------------------------------------
# Wrapper: batch-tiled pallas_call with resident (single-buffered) weights
# ----------------------------------------------------------------------------
def _round_up(x, m):
    return (x + m - 1) // m * m


def _const_spec(block_shape, single_buffer):
    """BlockSpec for a grid-invariant (weight) input: fetched once, optionally single-buffered."""
    ndim = len(block_shape)
    index_map = lambda i: (0,) * ndim
    if single_buffer and hasattr(pl, "Buffered"):
        # Block index never changes -> 1 buffer is enough; avoids 2x VMEM for the weights.
        return pl.BlockSpec(block_shape, index_map, pipeline_mode=pl.Buffered(1))
    return pl.BlockSpec(block_shape, index_map)


def emoca_mlp_forward(emoca_features, prep, *, tm_max=256, single_buffer_weights=True):
    x = emoca_features.astype(jnp.float32)
    B, in_size = x.shape
    hidden = prep["w1"].shape[1]
    out_size = prep["out_size"]

    # Batch tile: 256 feeds the 256-wide MXU on v6e/v7x (use tm_max=128 on v5e).
    tm = min(tm_max, _round_up(B, 8))
    b_pad = _round_up(B, tm)
    if b_pad != B:
        x = jnp.pad(x, ((0, b_pad - B), (0, 0)))     # zero rows; sliced off below
    x = x.astype(jnp.bfloat16)                        # halve activation DMA, bf16 MXU path

    grid = (b_pad // tm,)
    in_specs = [
        pl.BlockSpec((tm, in_size), lambda i: (i, 0)),            # activation tile (pipelined)
        _const_spec((in_size, hidden), single_buffer_weights),    # w1 (BN1 scale folded)
        _const_spec((hidden, hidden), single_buffer_weights),     # w2
        _const_spec((hidden, hidden), single_buffer_weights),     # w3
        _const_spec((hidden, hidden), single_buffer_weights),     # w4
        _const_spec((hidden, OUT_PAD), single_buffer_weights),    # wo (padded)
        _const_spec((8, hidden), single_buffer_weights),          # shift/bias slab
    ]
    out_specs = pl.BlockSpec((tm, OUT_PAD), lambda i: (i, 0))

    out = pl.pallas_call(
        _mlp_kernel,
        out_shape=jax.ShapeDtypeStruct((b_pad, OUT_PAD), jnp.float32),
        grid=grid,
        in_specs=in_specs,
        out_specs=out_specs,
        compiler_params=pltpu.CompilerParams(
            dimension_semantics=("parallel",),        # shard batch tiles across v7x's 2 TCs
            vmem_limit_bytes=48 * 1024 * 1024,        # fits bf16 weights at hidden=2048 everywhere
        ),
    )(x, prep["w1"], prep["w2"], prep["w3"], prep["w4"], prep["wo"], prep["slab"])

    out = out[:B, :out_size]
    expression = out[:, :8]
    arousal = out[:, 8]
    valence = out[:, 9]
    return valence, arousal, expression


def emoca_emo_recognition_f(emoca_features, params, **kwargs):
    prep = prepare_inference_params(params)
    return emoca_mlp_forward(emoca_features, prep, **kwargs)


# ----------------------------------------------------------------------------
# Deterministic parameter construction (synthetic, no checkpoint load)
# ----------------------------------------------------------------------------
def make_params(key, input_size, hidden_size, output_size):
    keys = jax.random.split(key, 16)

    def lin(k, fan_in, fan_out):
        kw, kb = jax.random.split(k)
        lim = 1.0 / jnp.sqrt(fan_in)
        w = jax.random.uniform(kw, (fan_in, fan_out), jnp.float32, -lim, lim)
        b = jax.random.uniform(kb, (fan_out,), jnp.float32, -lim, lim)
        return w, b

    p = {}
    p["w1"], p["b1"] = lin(keys[0], input_size, hidden_size)
    p["w2"], p["b2"] = lin(keys[1], hidden_size, hidden_size)
    p["w3"], p["b3"] = lin(keys[2], hidden_size, hidden_size)
    p["w4"], p["b4"] = lin(keys[3], hidden_size, hidden_size)
    p["wo"], p["bo"] = lin(keys[4], hidden_size, output_size)
    # BatchNorm1d eval-mode running stats / affine params (deterministic, non-trivial)
    for i, k in zip(range(1, 5), keys[5:9]):
        k1, k2, k3, k4 = jax.random.split(k, 4)
        p[f"g{i}"] = 1.0 + 0.1 * jax.random.normal(k1, (hidden_size,), jnp.float32)
        p[f"be{i}"] = 0.1 * jax.random.normal(k2, (hidden_size,), jnp.float32)
        p[f"m{i}"] = 0.05 * jax.random.normal(k3, (hidden_size,), jnp.float32)
        p[f"v{i}"] = 1.0 + 0.1 * jnp.abs(jax.random.normal(k4, (hidden_size,), jnp.float32))
    return p


# ----------------------------------------------------------------------------
# Glue equivalent of the torch.stack / torch.cat feature assembly (plain JAX)
# ----------------------------------------------------------------------------
def assemble_emoca_features(emoca_feature_dict):
    """{key: [array(B,), ...]} -> (B, total_features) float32."""
    stacked = [jnp.stack([f.astype(jnp.float32) for f in feats], axis=1)
               for feats in emoca_feature_dict.values()]
    return jnp.concatenate(stacked, axis=1).astype(jnp.float32)


if __name__ == "__main__":
    # Small shapes consistent with the module (defaults 334 -> 2048 x4 -> 10; reduced for test).
    B = 8
    INPUT_SIZE = 64
    HIDDEN = 256
    OUTPUT = 10     # must stay 10: [:8]=expression, [8]=arousal, [9]=valence

    key = jax.random.PRNGKey(0)
    k_params, k_a, k_b = jax.random.split(key, 3)
    params = make_params(k_params, INPUT_SIZE, HIDDEN, OUTPUT)

    # Mimic the dict-of-lists emoca_feature input: two keys, lists of (B,) arrays.
    n_a, n_b = 40, 24   # 40 + 24 = INPUT_SIZE
    feats_a = [jax.random.normal(jax.random.fold_in(k_a, i), (B,), jnp.float32)
               for i in range(n_a)]
    feats_b = [jax.random.normal(jax.random.fold_in(k_b, i), (B,), jnp.float32)
               for i in range(n_b)]
    emoca_feature = {"expcode": feats_a, "posecode": feats_b}
    emoca_features = assemble_emoca_features(emoca_feature)   # (B, INPUT_SIZE)

    try:
        valence, arousal, expression = emoca_emo_recognition_f(
            emoca_features, params, single_buffer_weights=True)
        jax.block_until_ready((valence, arousal, expression))
    except Exception:
        # Fallback if this JAX build rejects pl.Buffered(1) single-buffering of weights.
        valence, arousal, expression = emoca_emo_recognition_f(
            emoca_features, params, single_buffer_weights=False)
        jax.block_until_ready((valence, arousal, expression))

    # ------------------------------------------------------------------
    # Correctness checks
    # ------------------------------------------------------------------
    prep = prepare_inference_params(params)
    HI = jax.lax.Precision.HIGHEST

    # (1) The BN/bias fold matches eval-mode torch semantics (pure f32).
    def torch_ref_f32(x, p):
        h = x
        for i in range(1, 5):
            h = jnp.dot(h, p[f"w{i}"], precision=HI) + p[f"b{i}"]
            h = p[f"g{i}"] * (h - p[f"m{i}"]) / jnp.sqrt(p[f"v{i}"] + 1e-5) + p[f"be{i}"]
            h = jnp.where(h > 0, h, 0.2 * h)
        return jnp.dot(h, p["wo"], precision=HI) + p["bo"]

    def folded_ref_f32(x, p):
        h = x
        for i in range(1, 5):
            w_f, sh = _fold_layer(p[f"w{i}"], p[f"b{i}"], p[f"g{i}"],
                                  p[f"be{i}"], p[f"m{i}"], p[f"v{i}"])
            h = jnp.dot(h, w_f, precision=HI) + sh
            h = jnp.where(h > 0, h, 0.2 * h)
        return jnp.dot(h, p["wo"], precision=HI) + p["bo"]

    r_torch = torch_ref_f32(emoca_features, params)
    r_fold = folded_ref_f32(emoca_features, params)
    assert jnp.allclose(r_fold, r_torch, atol=1e-4, rtol=1e-4)

    # (2) The kernel matches a plain-JAX forward using the identical bf16 quantization.
    def matched_ref(x, prep):
        h = x.astype(jnp.bfloat16)
        for i in range(1, 5):
            h = jnp.dot(h, prep[f"w{i}"], preferred_element_type=jnp.float32)
            h = h + prep["slab"][i - 1, :]
            h = jnp.where(h > 0, h, 0.2 * h).astype(jnp.bfloat16)
        out = jnp.dot(h, prep["wo"], preferred_element_type=jnp.float32)
        out = out + prep["slab"][4, :OUT_PAD]
        return out[:, :prep["out_size"]]

    r_match = matched_ref(emoca_features, prep)
    assert jnp.allclose(expression, r_match[:, :8], atol=1e-2, rtol=1e-2)
    assert jnp.allclose(arousal, r_match[:, 8], atol=1e-2, rtol=1e-2)
    assert jnp.allclose(valence, r_match[:, 9], atol=1e-2, rtol=1e-2)
    assert expression.shape == (B, 8) and arousal.shape == (B,) and valence.shape == (B,)

    print("KERNEL_OK")
</pallas_src>

<mosaic_0001>
module attributes {stable_mosaic.version = 11 : i64} {
  func.func @_mlp_kernel(%arg0: i32, %arg1: memref<8x64xbf16, #tpu.memory_space<vmem>>, %arg2: memref<64x256xbf16, #tpu.memory_space<vmem>>, %arg3: memref<256x256xbf16, #tpu.memory_space<vmem>>, %arg4: memref<256x256xbf16, #tpu.memory_space<vmem>>, %arg5: memref<256x256xbf16, #tpu.memory_space<vmem>>, %arg6: memref<256x128xbf16, #tpu.memory_space<vmem>>, %arg7: memref<8x256xf32, #tpu.memory_space<vmem>>, %arg8: memref<8x128xf32, #tpu.memory_space<vmem>>) attributes {dimension_semantics = [#tpu.dimension_semantics<parallel>], iteration_bounds = array<i64: 1>, scalar_prefetch = 0 : i64, scratch_operands = 0 : i64, tpu.core_type = #tpu.core_type<tc>, window_params = [{transform_indices = @transform_0, window_bounds = array<i64: 8, 64>}, {pipeline_mode = #tpu.pipeline_mode<synchronous>, transform_indices = @transform_1, window_bounds = array<i64: 64, 256>}, {pipeline_mode = #tpu.pipeline_mode<synchronous>, transform_indices = @transform_2, window_bounds = array<i64: 256, 256>}, {pipeline_mode = #tpu.pipeline_mode<synchronous>, transform_indices = @transform_3, window_bounds = array<i64: 256, 256>}, {pipeline_mode = #tpu.pipeline_mode<synchronous>, transform_indices = @transform_4, window_bounds = array<i64: 256, 256>}, {pipeline_mode = #tpu.pipeline_mode<synchronous>, transform_indices = @transform_5, window_bounds = array<i64: 256, 128>}, {pipeline_mode = #tpu.pipeline_mode<synchronous>, transform_indices = @transform_6, window_bounds = array<i64: 8, 256>}, {transform_indices = @transform_7, window_bounds = array<i64: 8, 128>}]} {
    %c0 = arith.constant 0 : index
    %c0_0 = arith.constant 0 : index
    %0 = vector.load %arg1[%c0, %c0_0] : memref<8x64xbf16, #tpu.memory_space<vmem>>, vector<8x64xbf16>
    %c0_1 = arith.constant 0 : index
    %c0_2 = arith.constant 0 : index
    %1 = vector.load %arg2[%c0_1, %c0_2] : memref<64x256xbf16, #tpu.memory_space<vmem>>, vector<64x256xbf16>
    %cst = arith.constant dense<0.000000e+00> : vector<8x256xf32>
    %2 = tpu.matmul %0, %1, %cst {dimension_numbers = #tpu.dot_dimension_numbers<[1], [0], [0], [1], [0, 0, 1, 1], [], []>} : vector<8x64xbf16>, vector<64x256xbf16>, vector<8x256xf32> -> vector<8x256xf32>
    %c0_3 = arith.constant 0 : index
    %c0_4 = arith.constant 0 : index
    %3 = vector.load %arg7[%c0_3, %c0_4] : memref<8x256xf32, #tpu.memory_space<vmem>>, vector<1x256xf32>
    %4 = vector.broadcast %3 : vector<1x256xf32> to vector<8x256xf32>
    %5 = arith.addf %2, %4 : vector<8x256xf32>
    %cst_5 = arith.constant 0.000000e+00 : f32
    %6 = vector.broadcast %cst_5 : f32 to vector<8x256xf32>
    %7 = arith.cmpf ogt, %5, %6 : vector<8x256xf32>
    %cst_6 = arith.constant 2.000000e-01 : f32
    %8 = vector.broadcast %cst_6 : f32 to vector<8x256xf32>
    %9 = arith.mulf %8, %5 : vector<8x256xf32>
    %10 = arith.select %7, %5, %9 : vector<8x256xi1>, vector<8x256xf32>
    %11 = arith.truncf %10 : vector<8x256xf32> to vector<8x256xbf16>
    %c0_7 = arith.constant 0 : index
    %c0_8 = arith.constant 0 : index
    %12 = vector.load %arg3[%c0_7, %c0_8] : memref<256x256xbf16, #tpu.memory_space<vmem>>, vector<256x256xbf16>
    %cst_9 = arith.constant dense<0.000000e+00> : vector<8x256xf32>
    %13 = tpu.matmul %11, %12, %cst_9 {dimension_numbers = #tpu.dot_dimension_numbers<[1], [0], [0], [1], [0, 0, 1, 1], [], []>} : vector<8x256xbf16>, vector<256x256xbf16>, vector<8x256xf32> -> vector<8x256xf32>
    %c1 = arith.constant 1 : index
    %c0_10 = arith.constant 0 : index
    %14 = vector.load %arg7[%c1, %c0_10] : memref<8x256xf32, #tpu.memory_space<vmem>>, vector<1x256xf32>
    %15 = vector.broadcast %14 : vector<1x256xf32> to vector<8x256xf32>
    %16 = arith.addf %13, %15 : vector<8x256xf32>
    %cst_11 = arith.constant 0.000000e+00 : f32
    %17 = vector.broadcast %cst_11 : f32 to vector<8x256xf32>
    %18 = arith.cmpf ogt, %16, %17 : vector<8x256xf32>
    %cst_12 = arith.constant 2.000000e-01 : f32
    %19 = vector.broadcast %cst_12 : f32 to vector<8x256xf32>
    %20 = arith.mulf %19, %16 : vector<8x256xf32>
    %21 = arith.select %18, %16, %20 : vector<8x256xi1>, vector<8x256xf32>
    %22 = arith.truncf %21 : vector<8x256xf32> to vector<8x256xbf16>
    %c0_13 = arith.constant 0 : index
    %c0_14 = arith.constant 0 : index
    %23 = vector.load %arg4[%c0_13, %c0_14] : memref<256x256xbf16, #tpu.memory_space<vmem>>, vector<256x256xbf16>
    %cst_15 = arith.constant dense<0.000000e+00> : vector<8x256xf32>
    %24 = tpu.matmul %22, %23, %cst_15 {dimension_numbers = #tpu.dot_dimension_numbers<[1], [0], [0], [1], [0, 0, 1, 1], [], []>} : vector<8x256xbf16>, vector<256x256xbf16>, vector<8x256xf32> -> vector<8x256xf32>
    %c2 = arith.constant 2 : index
    %c0_16 = arith.constant 0 : index
    %25 = vector.load %arg7[%c2, %c0_16] : memref<8x256xf32, #tpu.memory_space<vmem>>, vector<1x256xf32>
    %26 = vector.broadcast %25 : vector<1x256xf32> to vector<8x256xf32>
    %27 = arith.addf %24, %26 : vector<8x256xf32>
    %cst_17 = arith.constant 0.000000e+00 : f32
    %28 = vector.broadcast %cst_17 : f32 to vector<8x256xf32>
    %29 = arith.cmpf ogt, %27, %28 : vector<8x256xf32>
    %cst_18 = arith.constant 2.000000e-01 : f32
    %30 = vector.broadcast %cst_18 : f32 to vector<8x256xf32>
    %31 = arith.mulf %30, %27 : vector<8x256xf32>
    %32 = arith.select %29, %27, %31 : vector<8x256xi1>, vector<8x256xf32>
    %33 = arith.truncf %32 : vector<8x256xf32> to vector<8x256xbf16>
    %c0_19 = arith.constant 0 : index
    %c0_20 = arith.constant 0 : index
    %34 = vector.load %arg5[%c0_19, %c0_20] : memref<256x256xbf16, #tpu.memory_space<vmem>>, vector<256x256xbf16>
    %cst_21 = arith.constant dense<0.000000e+00> : vector<8x256xf32>
    %35 = tpu.matmul %33, %34, %cst_21 {dimension_numbers = #tpu.dot_dimension_numbers<[1], [0], [0], [1], [0, 0, 1, 1], [], []>} : vector<8x256xbf16>, vector<256x256xbf16>, vector<8x256xf32> -> vector<8x256xf32>
    %c3 = arith.constant 3 : index
    %c0_22 = arith.constant 0 : index
    %36 = vector.load %arg7[%c3, %c0_22] : memref<8x256xf32, #tpu.memory_space<vmem>>, vector<1x256xf32>
    %37 = vector.broadcast %36 : vector<1x256xf32> to vector<8x256xf32>
    %38 = arith.addf %35, %37 : vector<8x256xf32>
    %cst_23 = arith.constant 0.000000e+00 : f32
    %39 = vector.broadcast %cst_23 : f32 to vector<8x256xf32>
    %40 = arith.cmpf ogt, %38, %39 : vector<8x256xf32>
    %cst_24 = arith.constant 2.000000e-01 : f32
    %41 = vector.broadcast %cst_24 : f32 to vector<8x256xf32>
    %42 = arith.mulf %41, %38 : vector<8x256xf32>
    %43 = arith.select %40, %38, %42 : vector<8x256xi1>, vector<8x256xf32>
    %44 = arith.truncf %43 : vector<8x256xf32> to vector<8x256xbf16>
    %c0_25 = arith.constant 0 : index
    %c0_26 = arith.constant 0 : index
    %45 = vector.load %arg6[%c0_25, %c0_26] : memref<256x128xbf16, #tpu.memory_space<vmem>>, vector<256x128xbf16>
    %cst_27 = arith.constant dense<0.000000e+00> : vector<8x128xf32>
    %46 = tpu.matmul %44, %45, %cst_27 {dimension_numbers = #tpu.dot_dimension_numbers<[1], [0], [0], [1], [0, 0, 1, 1], [], []>} : vector<8x256xbf16>, vector<256x128xbf16>, vector<8x128xf32> -> vector<8x128xf32>
    %c4 = arith.constant 4 : index
    %c0_28 = arith.constant 0 : index
    %47 = vector.load %arg7[%c4, %c0_28] : memref<8x256xf32, #tpu.memory_space<vmem>>, vector<1x128xf32>
    %48 = vector.broadcast %47 : vector<1x128xf32> to vector<8x128xf32>
    %49 = arith.addf %46, %48 : vector<8x128xf32>
    %c0_29 = arith.constant 0 : index
    %c0_30 = arith.constant 0 : index
    %50 = vector.load %arg8[%c0_29, %c0_30] : memref<8x128xf32, #tpu.memory_space<vmem>>, vector<8x128xf32>
    tpu.vector_store %arg8[%c0_29, %c0_30], %49 {strides = array<i32>} : memref<8x128xf32, #tpu.memory_space<vmem>>, vector<8x128xf32>,
    return
  }
  func.func @transform_0(%arg0: i32) -> (i32, i32) {
    %c0_i32 = arith.constant 0 : i32
    %c0_i32_0 = arith.constant 0 : i32
    return %arg0, %c0_i32 : i32, i32
  }
  func.func @transform_1(%arg0: i32) -> (i32, i32) {
    %c0_i32 = arith.constant 0 : i32
    %c0_i32_0 = arith.constant 0 : i32
    %c0_i32_1 = arith.constant 0 : i32
    return %c0_i32, %c0_i32_0 : i32, i32
  }
  func.func @transform_2(%arg0: i32) -> (i32, i32) {
    %c0_i32 = arith.constant 0 : i32
    %c0_i32_0 = arith.constant 0 : i32
    %c0_i32_1 = arith.constant 0 : i32
    return %c0_i32, %c0_i32_0 : i32, i32
  }
  func.func @transform_3(%arg0: i32) -> (i32, i32) {
    %c0_i32 = arith.constant 0 : i32
    %c0_i32_0 = arith.constant 0 : i32
    %c0_i32_1 = arith.constant 0 : i32
    return %c0_i32, %c0_i32_0 : i32, i32
  }
  func.func @transform_4(%arg0: i32) -> (i32, i32) {
    %c0_i32 = arith.constant 0 : i32
    %c0_i32_0 = arith.constant 0 : i32
    %c0_i32_1 = arith.constant 0 : i32
    return %c0_i32, %c0_i32_0 : i32, i32
  }
  func.func @transform_5(%arg0: i32) -> (i32, i32) {
    %c0_i32 = arith.constant 0 : i32
    %c0_i32_0 = arith.constant 0 : i32
    %c0_i32_1 = arith.constant 0 : i32
    return %c0_i32, %c0_i32_0 : i32, i32
  }
  func.func @transform_6(%arg0: i32) -> (i32, i32) {
    %c0_i32 = arith.constant 0 : i32
    %c0_i32_0 = arith.constant 0 : i32
    %c0_i32_1 = arith.constant 0 : i32
    return %c0_i32, %c0_i32_0 : i32, i32
  }
  func.func @transform_7(%arg0: i32) -> (i32, i32) {
    %c0_i32 = arith.constant 0 : i32
    %c0_i32_0 = arith.constant 0 : i32
    return %arg0, %c0_i32 : i32, i32
  }
}

module attributes {stable_mosaic.version = 11 : i64} {
  func.func @_mlp_kernel(%arg0: i32, %arg1: memref<8x64xbf16, #tpu.memory_space<vmem>>, %arg2: memref<64x256xbf16, #tpu.memory_space<vmem>>, %arg3: memref<256x256xbf16, #tpu.memory_space<vmem>>, %arg4: memref<256x256xbf16, #tpu.memory_space<vmem>>, %arg5: memref<256x256xbf16, #tpu.memory_space<vmem>>, %arg6: memref<256x128xbf16, #tpu.memory_space<vmem>>, %arg7: memref<8x256xf32, #tpu.memory_space<vmem>>, %arg8: memref<8x128xf32, #tpu.memory_space<vmem>>) attributes {dimension_semantics = [#tpu.dimension_semantics<parallel>], iteration_bounds = array<i64: 1>, scalar_prefetch = 0 : i64, scratch_operands = 0 : i64, tpu.core_type = #tpu.core_type<tc>, window_params = [{transform_indices = @transform_0, window_bounds = array<i64: 8, 64>}, {pipeline_mode = #tpu.pipeline_mode<synchronous>, transform_indices = @transform_1, window_bounds = array<i64: 64, 256>}, {pipeline_mode = #tpu.pipeline_mode<synchronous>, transform_indices = @transform_2, window_bounds = array<i64: 256, 256>}, {pipeline_mode = #tpu.pipeline_mode<synchronous>, transform_indices = @transform_3, window_bounds = array<i64: 256, 256>}, {pipeline_mode = #tpu.pipeline_mode<synchronous>, transform_indices = @transform_4, window_bounds = array<i64: 256, 256>}, {pipeline_mode = #tpu.pipeline_mode<synchronous>, transform_indices = @transform_5, window_bounds = array<i64: 256, 128>}, {pipeline_mode = #tpu.pipeline_mode<synchronous>, transform_indices = @transform_6, window_bounds = array<i64: 8, 256>}, {transform_indices = @transform_7, window_bounds = array<i64: 8, 128>}]} {
    %c0 = arith.constant 0 : index
    %c0_0 = arith.constant 0 : index
    %0 = vector.load %arg1[%c0, %c0_0] : memref<8x64xbf16, #tpu.memory_space<vmem>>, vector<8x64xbf16>
    %c0_1 = arith.constant 0 : index
    %c0_2 = arith.constant 0 : index
    %1 = vector.load %arg2[%c0_1, %c0_2] : memref<64x256xbf16, #tpu.memory_space<vmem>>, vector<64x256xbf16>
    %cst = arith.constant dense<0.000000e+00> : vector<8x256xf32>
    %2 = tpu.matmul %0, %1, %cst {dimension_numbers = #tpu.dot_dimension_numbers<[1], [0], [0], [1], [0, 0, 1, 1], [], []>} : vector<8x64xbf16>, vector<64x256xbf16>, vector<8x256xf32> -> vector<8x256xf32>
    %c0_3 = arith.constant 0 : index
    %c0_4 = arith.constant 0 : index
    %3 = vector.load %arg7[%c0_3, %c0_4] : memref<8x256xf32, #tpu.memory_space<vmem>>, vector<1x256xf32>
    %4 = vector.broadcast %3 : vector<1x256xf32> to vector<8x256xf32>
    %5 = arith.addf %2, %4 : vector<8x256xf32>
    %cst_5 = arith.constant 0.000000e+00 : f32
    %6 = vector.broadcast %cst_5 : f32 to vector<8x256xf32>
    %7 = arith.cmpf ogt, %5, %6 : vector<8x256xf32>
    %cst_6 = arith.constant 2.000000e-01 : f32
    %8 = vector.broadcast %cst_6 : f32 to vector<8x256xf32>
    %9 = arith.mulf %8, %5 : vector<8x256xf32>
    %10 = arith.select %7, %5, %9 : vector<8x256xi1>, vector<8x256xf32>
    %11 = arith.truncf %10 : vector<8x256xf32> to vector<8x256xbf16>
    %c0_7 = arith.constant 0 : index
    %c0_8 = arith.constant 0 : index
    %12 = vector.load %arg3[%c0_7, %c0_8] : memref<256x256xbf16, #tpu.memory_space<vmem>>, vector<256x256xbf16>
    %cst_9 = arith.constant dense<0.000000e+00> : vector<8x256xf32>
    %13 = tpu.matmul %11, %12, %cst_9 {dimension_numbers = #tpu.dot_dimension_numbers<[1], [0], [0], [1], [0, 0, 1, 1], [], []>} : vector<8x256xbf16>, vector<256x256xbf16>, vector<8x256xf32> -> vector<8x256xf32>
    %c1 = arith.constant 1 : index
    %c0_10 = arith.constant 0 : index
    %14 = vector.load %arg7[%c1, %c0_10] : memref<8x256xf32, #tpu.memory_space<vmem>>, vector<1x256xf32>
    %15 = vector.broadcast %14 : vector<1x256xf32> to vector<8x256xf32>
    %16 = arith.addf %13, %15 : vector<8x256xf32>
    %cst_11 = arith.constant 0.000000e+00 : f32
    %17 = vector.broadcast %cst_11 : f32 to vector<8x256xf32>
    %18 = arith.cmpf ogt, %16, %17 : vector<8x256xf32>
    %cst_12 = arith.constant 2.000000e-01 : f32
    %19 = vector.broadcast %cst_12 : f32 to vector<8x256xf32>
    %20 = arith.mulf %19, %16 : vector<8x256xf32>
    %21 = arith.select %18, %16, %20 : vector<8x256xi1>, vector<8x256xf32>
    %22 = arith.truncf %21 : vector<8x256xf32> to vector<8x256xbf16>
    %c0_13 = arith.constant 0 : index
    %c0_14 = arith.constant 0 : index
    %23 = vector.load %arg4[%c0_13, %c0_14] : memref<256x256xbf16, #tpu.memory_space<vmem>>, vector<256x256xbf16>
    %cst_15 = arith.constant dense<0.000000e+00> : vector<8x256xf32>
    %24 = tpu.matmul %22, %23, %cst_15 {dimension_numbers = #tpu.dot_dimension_numbers<[1], [0], [0], [1], [0, 0, 1, 1], [], []>} : vector<8x256xbf16>, vector<256x256xbf16>, vector<8x256xf32> -> vector<8x256xf32>
    %c2 = arith.constant 2 : index
    %c0_16 = arith.constant 0 : index
    %25 = vector.load %arg7[%c2, %c0_16] : memref<8x256xf32, #tpu.memory_space<vmem>>, vector<1x256xf32>
    %26 = vector.broadcast %25 : vector<1x256xf32> to vector<8x256xf32>
    %27 = arith.addf %24, %26 : vector<8x256xf32>
    %cst_17 = arith.constant 0.000000e+00 : f32
    %28 = vector.broadcast %cst_17 : f32 to vector<8x256xf32>
    %29 = arith.cmpf ogt, %27, %28 : vector<8x256xf32>
    %cst_18 = arith.constant 2.000000e-01 : f32
    %30 = vector.broadcast %cst_18 : f32 to vector<8x256xf32>
    %31 = arith.mulf %30, %27 : vector<8x256xf32>
    %32 = arith.select %29, %27, %31 : vector<8x256xi1>, vector<8x256xf32>
    %33 = arith.truncf %32 : vector<8x256xf32> to vector<8x256xbf16>
    %c0_19 = arith.constant 0 : index
    %c0_20 = arith.constant 0 : index
    %34 = vector.load %arg5[%c0_19, %c0_20] : memref<256x256xbf16, #tpu.memory_space<vmem>>, vector<256x256xbf16>
    %cst_21 = arith.constant dense<0.000000e+00> : vector<8x256xf32>
    %35 = tpu.matmul %33, %34, %cst_21 {dimension_numbers = #tpu.dot_dimension_numbers<[1], [0], [0], [1], [0, 0, 1, 1], [], []>} : vector<8x256xbf16>, vector<256x256xbf16>, vector<8x256xf32> -> vector<8x256xf32>
    %c3 = arith.constant 3 : index
    %c0_22 = arith.constant 0 : index
    %36 = vector.load %arg7[%c3, %c0_22] : memref<8x256xf32, #tpu.memory_space<vmem>>, vector<1x256xf32>
    %37 = vector.broadcast %36 : vector<1x256xf32> to vector<8x256xf32>
    %38 = arith.addf %35, %37 : vector<8x256xf32>
    %cst_23 = arith.constant 0.000000e+00 : f32
    %39 = vector.broadcast %cst_23 : f32 to vector<8x256xf32>
    %40 = arith.cmpf ogt, %38, %39 : vector<8x256xf32>
    %cst_24 = arith.constant 2.000000e-01 : f32
    %41 = vector.broadcast %cst_24 : f32 to vector<8x256xf32>
    %42 = arith.mulf %41, %38 : vector<8x256xf32>
    %43 = arith.select %40, %38, %42 : vector<8x256xi1>, vector<8x256xf32>
    %44 = arith.truncf %43 : vector<8x256xf32> to vector<8x256xbf16>
    %c0_25 = arith.constant 0 : index
    %c0_26 = arith.constant 0 : index
    %45 = vector.load %arg6[%c0_25, %c0_26] : memref<256x128xbf16, #tpu.memory_space<vmem>>, vector<256x128xbf16>
    %cst_27 = arith.constant dense<0.000000e+00> : vector<8x128xf32>
    %46 = tpu.matmul %44, %45, %cst_27 {dimension_numbers = #tpu.dot_dimension_numbers<[1], [0], [0], [1], [0, 0, 1, 1], [], []>} : vector<8x256xbf16>, vector<256x128xbf16>, vector<8x128xf32> -> vector<8x128xf32>
    %c4 = arith.constant 4 : index
    %c0_28 = arith.constant 0 : index
    %47 = vector.load %arg7[%c4, %c0_28] : memref<8x256xf32, #tpu.memory_space<vmem>>, vector<1x128xf32>
    %48 = vector.broadcast %47 : vector<1x128xf32> to vector<8x128xf32>
    %49 = arith.addf %46, %48 : vector<8x128xf32>
    %c0_29 = arith.constant 0 : index
    %c0_30 = arith.constant 0 : index
    %50 = vector.load %arg8[%c0_29, %c0_30] : memref<8x128xf32, #tpu.memory_space<vmem>>, vector<8x128xf32>
    tpu.vector_store %arg8[%c0_29, %c0_30], %49 {strides = array<i32>} : memref<8x128xf32, #tpu.memory_space<vmem>>, vector<8x128xf32>,
    return
  }
  func.func @transform_0(%arg0: i32) -> (i32, i32) {
    %c0_i32 = arith.constant 0 : i32
    %c0_i32_0 = arith.constant 0 : i32
    return %arg0, %c0_i32 : i32, i32
  }
  func.func @transform_1(%arg0: i32) -> (i32, i32) {
    %c0_i32 = arith.constant 0 : i32
    %c0_i32_0 = arith.constant 0 : i32
    %c0_i32_1 = arith.constant 0 : i32
    return %c0_i32, %c0_i32_0 : i32, i32
  }
  func.func @transform_2(%arg0: i32) -> (i32, i32) {
    %c0_i32 = arith.constant 0 : i32
    %c0_i32_0 = arith.constant 0 : i32
    %c0_i32_1 = arith.constant 0 : i32
    return %c0_i32, %c0_i32_0 : i32, i32
  }
  func.func @transform_3(%arg0: i32) -> (i32, i32) {
    %c0_i32 = arith.constant 0 : i32
    %c0_i32_0 = arith.constant 0 : i32
    %c0_i32_1 = arith.constant 0 : i32
    return %c0_i32, %c0_i32_0 : i32, i32
  }
  func.func @transform_4(%arg0: i32) -> (i32, i32) {
    %c0_i32 = arith.constant 0 : i32
    %c0_i32_0 = arith.constant 0 : i32
    %c0_i32_1 = arith.constant 0 : i32
    return %c0_i32, %c0_i32_0 : i32, i32
  }
  func.func @transform_5(%arg0: i32) -> (i32, i32) {
    %c0_i32 = arith.constant 0 : i32
    %c0_i32_0 = arith.constant 0 : i32
    %c0_i32_1 = arith.constant 0 : i32
    return %c0_i32, %c0_i32_0 : i32, i32
  }
  func.func @transform_6(%arg0: i32) -> (i32, i32) {
    %c0_i32 = arith.constant 0 : i32
    %c0_i32_0 = arith.constant 0 : i32
    %c0_i32_1 = arith.constant 0 : i32
    return %c0_i32, %c0_i32_0 : i32, i32
  }
  func.func @transform_7(%arg0: i32) -> (i32, i32) {
    %c0_i32 = arith.constant 0 : i32
    %c0_i32_0 = arith.constant 0 : i32
    return %arg0, %c0_i32 : i32, i32
  }
}

</mosaic_0001>

<llo_original>
// kernel: tpu_custom_call.1
$region0: #{tpu_custom_call.1}
  #allocation0 [shape = 'u32[]', space=smem, size = 0x4, offset = 0x4, fixed_abs, tag = 'smem constant byte address 0x4 - core index']
  #allocation1 [shape = 'u32[144,128]{1,0:T(1,128)}', space=vmem, size = 0x12000, scoped, tag = 'internal scratch']
  %s0 = inlined_call_operand.hbm [shape: bf16[8,64], index: 0, kind: input, shape index: {}]
  %s1 = inlined_call_operand.hbm [shape: bf16[64,256], index: 1, kind: input, shape index: {}]
  %s2 = inlined_call_operand.hbm [shape: bf16[256,256], index: 2, kind: input, shape index: {}]
  %s3 = inlined_call_operand.hbm [shape: bf16[256,256], index: 3, kind: input, shape index: {}]
  %s4 = inlined_call_operand.hbm [shape: bf16[256,256], index: 4, kind: input, shape index: {}]
  %s5 = inlined_call_operand.hbm [shape: bf16[256,128], index: 5, kind: input, shape index: {}]
  %s6 = inlined_call_operand.vmem [shape: f32[8,256], index: 6, kind: input, shape index: {}]
  %s7 = inlined_call_operand.hbm [shape: f32[8,128], index: 7, kind: output, shape index: {}]
  %s8 = sld [smem:[#allocation0]]
  $region62: #{tpu_custom_call.1} parent=0
    _
  %s10 = ssub.s32 1, %s8
  %s11 = scalar_select 0, %s10, %s8
  $region1: #{tpu_custom_call.1} parent=0
    #allocation2 [shape = 'u8[2048]{0}', space=vmem, size = 0x800, scoped, tag = 'input window, operand 0, single buffered']
    #allocation3 [shape = 's32[1]{0}', space=sflag, size = 0x4, scoped, tag = 'scoped memory for tpu_custom_call.1']
    #allocation4 [shape = 's32[1]{0}', space=sflag, size = 0x4, scoped, tag = 'scoped memory for tpu_custom_call.1']
    #allocation5 [shape = 'u8[32768]{0}', space=vmem, size = 0x8000, scoped, tag = 'input window, operand 1, single buffered']
    #allocation6 [shape = 's32[1]{0}', space=sflag, size = 0x4, scoped, tag = 'scoped memory for tpu_custom_call.1']
    #allocation7 [shape = 'u8[131072]{0}', space=vmem, size = 0x20000, scoped, tag = 'input window, operand 2, single buffered']
    #allocation8 [shape = 'u8[131072]{0}', space=vmem, size = 0x20000, scoped, tag = 'input window, operand 3, single buffered']
    #allocation9 [shape = 's32[1]{0}', space=sflag, size = 0x4, scoped, tag = 'scoped memory for tpu_custom_call.1']
    #allocation10 [shape = 'u8[131072]{0}', space=vmem, size = 0x20000, scoped, tag = 'input window, operand 4, single buffered']
    #allocation11 [shape = 'u8[65536]{0}', space=vmem, size = 0x10000, scoped, tag = 'input window, operand 5, single buffered']
    #allocation12 [shape = 's32[1]{0}', space=sflag, size = 0x4, scoped, tag = 'scoped memory for tpu_custom_call.1']
    #allocation13 [shape = 'u8[4096]{0}', space=vmem, size = 0x1000, scoped, tag = 'output window, operand 0, single buffered']
    %12 = vsyncpa [#allocation3], 0
    %13 = vsyncpa [#allocation6], 0
    %14 = vsyncpa [#allocation9], 0
    %15 = vsyncpa [#allocation12], 0
    %16 = vsyncpa [#allocation4], 0
    // Predicated region
    $region2: #{tpu_custom_call.1} parent=1 // pred_check
      _
    $region3: #{tpu_custom_call.1} parent=1 // pred_check_branch
      %18 = sbr.rel (0) target = $region5
    $region4: #{tpu_custom_call.1} parent=1 // pred_region
      %s20 = ssub.s32 64, 64
      %21 = vsyncadd [#allocation3], %s20
      %s23 = sshll.u32 [#allocation2], 4
      %s24 = int_to_ptr.vmem [resolvable:$true] %s23
      %26 = dma.hbm_to_vmem [thread:$0]  %s0, 64, %s24, [#allocation3]
    $region5: #{tpu_custom_call.1} parent=1 // pred_fallthru
      _
    // Predicated region
    $region6: #{tpu_custom_call.1} parent=1 // pred_check
      _
    $region7: #{tpu_custom_call.1} parent=1 // pred_check_branch
      %28 = sbr.rel (0) target = $region9
    $region8: #{tpu_custom_call.1} parent=1 // pred_region
      %s30 = ssub.s32 1024, 1024
      %31 = vsyncadd [#allocation6], %s30
      %s32 = sshll.u32 [#allocation5], 4
      %s33 = int_to_ptr.vmem [resolvable:$true] %s32
      %38 = dma.hbm_to_vmem [thread:$0]  %s1, 1024, %s33, [#allocation6], 128, 128, 8
    $region9: #{tpu_custom_call.1} parent=1 // pred_fallthru
      _
    // Predicated region
    $region10: #{tpu_custom_call.1} parent=1 // pred_check
      _
    $region11: #{tpu_custom_call.1} parent=1 // pred_check_branch
      %40 = sbr.rel (0) target = $region13
    $region12: #{tpu_custom_call.1} parent=1 // pred_region
      %s42 = ssub.s32 4096, 4096
      %43 = vsyncadd [#allocation6], %s42
      %s44 = sshll.u32 [#allocation7], 4
      %s45 = int_to_ptr.vmem [resolvable:$true] %s44
      %50 = dma.hbm_to_vmem [thread:$0]  %s2, 4096, %s45, [#allocation6], 128, 128, 8
    $region13: #{tpu_custom_call.1} parent=1 // pred_fallthru
      _
    // Predicated region
    $region14: #{tpu_custom_call.1} parent=1 // pred_check
      _
    $region15: #{tpu_custom_call.1} parent=1 // pred_check_branch
      %52 = sbr.rel (0) target = $region17
    $region16: #{tpu_custom_call.1} parent=1 // pred_region
      %s54 = ssub.s32 4096, 4096
      %55 = vsyncadd [#allocation9], %s54
      %s56 = sshll.u32 [#allocation8], 4
      %s57 = int_to_ptr.vmem [resolvable:$true] %s56
      %62 = dma.hbm_to_vmem [thread:$0]  %s3, 4096, %s57, [#allocation9], 128, 128, 8
    $region17: #{tpu_custom_call.1} parent=1 // pred_fallthru
      _
    // Predicated region
    $region18: #{tpu_custom_call.1} parent=1 // pred_check
      _
    $region19: #{tpu_custom_call.1} parent=1 // pred_check_branch
      %64 = sbr.rel (0) target = $region21
    $region20: #{tpu_custom_call.1} parent=1 // pred_region
      %s66 = ssub.s32 4096, 4096
      %67 = vsyncadd [#allocation9], %s66
      %s68 = sshll.u32 [#allocation10], 4
      %s69 = int_to_ptr.vmem [resolvable:$true] %s68
      %74 = dma.hbm_to_vmem [thread:$0]  %s4, 4096, %s69, [#allocation9], 128, 128, 8
    $region21: #{tpu_custom_call.1} parent=1 // pred_fallthru
      _
    // Predicated region
    $region22: #{tpu_custom_call.1} parent=1 // pred_check
      _
    $region23: #{tpu_custom_call.1} parent=1 // pred_check_branch
      %76 = sbr.rel (0) target = $region25
    $region24: #{tpu_custom_call.1} parent=1 // pred_region
      %s78 = ssub.s32 2048, 2048
      %79 = vsyncadd [#allocation12], %s78
      %s80 = sshll.u32 [#allocation11], 4
      %s81 = int_to_ptr.vmem [resolvable:$true] %s80
      %86 = dma.hbm_to_vmem [thread:$0]  %s5, 2048, %s81, [#allocation12], 64, 64, 4
    $region25: #{tpu_custom_call.1} parent=1 // pred_fallthru
      _
    // Predicated region
    $region26: #{tpu_custom_call.1} parent=1 // pred_check
      _
    $region27: #{tpu_custom_call.1} parent=1 // pred_check_branch
      %88 = sbr.rel (0) target = $region29
    $region28: #{tpu_custom_call.1} parent=1 // pred_region
      _
    $region29: #{tpu_custom_call.1} parent=1 // pred_fallthru
      _
    // Predicated region
    $region30: #{tpu_custom_call.1} parent=1 // pred_check
      _
    $region31: #{tpu_custom_call.1} parent=1 // pred_check_branch
      %90 = sbr.rel (0) target = $region33
    $region32: #{tpu_custom_call.1} parent=1 // pred_region
      %91 = dma.done [#allocation3], 64
    $region33: #{tpu_custom_call.1} parent=1 // pred_fallthru
      _
    // Predicated region
    $region34: #{tpu_custom_call.1} parent=1 // pred_check
      _
    $region35: #{tpu_custom_call.1} parent=1 // pred_check_branch
      %93 = sbr.rel (0) target = $region37
    $region36: #{tpu_custom_call.1} parent=1 // pred_region
      %94 = dma.done [#allocation6], 1024
    $region37: #{tpu_custom_call.1} parent=1 // pred_fallthru
      _
    // Predicated region
    $region38: #{tpu_custom_call.1} parent=1 // pred_check
      _
    $region39: #{tpu_custom_call.1} parent=1 // pred_check_branch
      %96 = sbr.rel (0) target = $region41
    $region40: #{tpu_custom_call.1} parent=1 // pred_region
      %97 = dma.done [#allocation6], 4096
    $region41: #{tpu_custom_call.1} parent=1 // pred_fallthru
      _
    // Predicated region
    $region42: #{tpu_custom_call.1} parent=1 // pred_check
      _
    $region43: #{tpu_custom_call.1} parent=1 // pred_check_branch
      %99 = sbr.rel (0) target = $region45
    $region44: #{tpu_custom_call.1} parent=1 // pred_region
      %100 = dma.done [#allocation9], 4096
    $region45: #{tpu_custom_call.1} parent=1 // pred_fallthru
      _
    // Predicated region
    $region46: #{tpu_custom_call.1} parent=1 // pred_check
      _
    $region47: #{tpu_custom_call.1} parent=1 // pred_check_branch
      %102 = sbr.rel (0) target = $region49
    $region48: #{tpu_custom_call.1} parent=1 // pred_region
      %103 = dma.done [#allocation9], 4096
    $region49: #{tpu_custom_call.1} parent=1 // pred_fallthru
      _
    // Predicated region
    $region50: #{tpu_custom_call.1} parent=1 // pred_check
      _
    $region51: #{tpu_custom_call.1} parent=1 // pred_check_branch
      %105 = sbr.rel (0) target = $region53
    $region52: #{tpu_custom_call.1} parent=1 // pred_region
      %106 = dma.done [#allocation12], 2048
    $region53: #{tpu_custom_call.1} parent=1 // pred_fallthru
      _
    %v108 = vld [vmem:[#allocation2] sm:$0xf]
    %v109 = vld [vmem:[#allocation5] sm:$0xff]
    %v110 = vld [vmem:[#allocation5 + $0x8] sm:$0xff]
    %v111 = vld [vmem:[#allocation5 + $0x10] sm:$0xff]
    %v112 = vld [vmem:[#allocation5 + $0x18] sm:$0xff]
    %v113 = vld [vmem:[#allocation5 + $0x20] sm:$0xff]
    %v114 = vld [vmem:[#allocation5 + $0x28] sm:$0xff]
    %v115 = vld [vmem:[#allocation5 + $0x30] sm:$0xff]
    %v116 = vld [vmem:[#allocation5 + $0x38] sm:$0xff]
    %v117 = vld [vmem:[%s6] ss:$8 sm:$0x3]
    %v119 = vlaneseq
    %v120 = vshrl.u32 %v119, 7
    %v121 = vsub.s32 0, %v120
    %v122 = vrot.slane %v117, %v121
    %v123 = vlaneseq
    %v124 = vshrl.u32 %v123, 7
    %v125 = vsub.s32 1, %v124
    %v126 = vrot.slane %v117, %v125
    %v137 = vunpack.c.l.b16 %v109
    %v138 = vunpack.c.h.b16 %v109
    %v139 = vunpack.c.l.b16 %v110
    %v140 = vunpack.c.h.b16 %v110
    %v141 = vunpack.c.l.b16 %v111
    %v142 = vunpack.c.h.b16 %v111
    %v143 = vunpack.c.l.b16 %v112
    %v144 = vunpack.c.h.b16 %v112
    %v145 = vunpack.c.l.b16 %v113
    %v146 = vunpack.c.h.b16 %v113
    %v147 = vunpack.c.l.b16 %v114
    %v148 = vunpack.c.h.b16 %v114
    %v149 = vunpack.c.l.b16 %v115
    %v150 = vunpack.c.h.b16 %v115
    %v151 = vunpack.c.l.b16 %v116
    %v152 = vunpack.c.h.b16 %v116
    %v153 = vpack.c.b16 %v139, %v137
    %v154 = vpack.c.b16 %v140, %v138
    %v155 = vpack.c.b16 %v143, %v141
    %v156 = vpack.c.b16 %v144, %v142
    %v157 = vpack.c.b16 %v147, %v145
    %v158 = vpack.c.b16 %v148, %v146
    %v159 = vpack.c.b16 %v151, %v149
    %v160 = vpack.c.b16 %v152, %v150
    %vm169 = vcmask 523264
    %v171 = vsel %vm169, %v108, 0
    %173 = vmatprep.subr.bf16.mxu0 %v154
    %174 = vmatpush1.bf16.msra.mxu0 %v153
    %175 = vmatprep.subr.bf16.mxu0 %v156
    %176 = vmatpush1.bf16.msra.mxu0 %v155
    %177 = vmatprep.subr.bf16.mxu0 %v158
    %178 = vmatpush1.bf16.msra.mxu0 %v157
    %179 = vmatprep.subr.bf16.mxu0 %v160
    %180 = vmatpush1.bf16.msra.mxu0 %v159
    %181 = vmatprep.subr.bf16.mxu0 0
    %182 = vmatpush1.bf16.msra.mxu0 0
    %183 = vmatprep.subr.bf16.mxu0 0
    %184 = vmatpush1.bf16.msra.mxu0 0
    %185 = vmatprep.subr.bf16.mxu0 0
    %186 = vmatpush1.bf16.msra.mxu0 0
    %187 = vmatprep.subr.bf16.mxu0 0
    %188 = vmatpush1.bf16.msra.mxu0 0
    %189 = vmatprep.subr.bf16.mxu0 0
    %190 = vmatpush1.bf16.msra.mxu0 0
    %191 = vmatprep.subr.bf16.mxu0 0
    %192 = vmatpush1.bf16.msra.mxu0 0
    %193 = vmatprep.subr.bf16.mxu0 0
    %194 = vmatpush1.bf16.msra.mxu0 0
    %195 = vmatprep.subr.bf16.mxu0 0
    %196 = vmatpush1.bf16.msra.mxu0 0
    %197 = vmatprep.subr.bf16.mxu0 0
    %198 = vmatpush1.bf16.msra.mxu0 0
    %199 = vmatprep.subr.bf16.mxu0 0
    %200 = vmatpush1.bf16.msra.mxu0 0
    %201 = vmatprep.subr.bf16.mxu0 0
    %202 = vmatpush1.bf16.msra.mxu0 0
    %203 = vmatprep.subr.bf16.mxu0 0
    %204 = vmatpush1.bf16.msra.mxu0 0
    %205 = vmatprep.mubr.bf16.mxu0 0
    %206 = vmatmul.mubr.bf16.gmra.mrb[0].mxu0 %v171
    %v207 = vpop.f32.mrb[0].mxu0
    %v208 = vadd.f32 %v122, %v207
    %v209 = vpop.f32.mrb[0].mxu0
    %v210 = vadd.f32 %v126, %v209
    %v211 = vpop.f32.mrb[0].mxu0
    %v212 = vpop.f32.mrb[0].mxu0
    %213 = vdwg.mxu0
    %vm214 = vcmp.gt.f32.partialorder %v208, 0.0
    %vm215 = vcmp.gt.f32.partialorder %v210, 0.0
    %v216 = vmul.f32 %v208, 0.2
    %v217 = vmul.f32 %v210, 0.2
    %v218 = vsel %vm214, %v208, %v216
    %v219 = vsel %vm215, %v210, %v217
    %v220 = vpack.c.bf16 %v218, %v218
    %v221 = vpack.c.bf16 %v219, %v219
    %v222 = vld [vmem:[#allocation7] sm:$0xff]
    %v223 = vld [vmem:[#allocation7 + $0x8] sm:$0xff]
    %v224 = vld [vmem:[#allocation7 + $0x10] sm:$0xff]
    %v225 = vld [vmem:[#allocation7 + $0x18] sm:$0xff]
    %v226 = vld [vmem:[#allocation7 + $0x20] sm:$0xff]
    %v227 = vld [vmem:[#allocation7 + $0x28] sm:$0xff]
    %v228 = vld [vmem:[#allocation7 + $0x30] sm:$0xff]
    %v229 = vld [vmem:[#allocation7 + $0x38] sm:$0xff]
    %v230 = vld [vmem:[#allocation7 + $0x40] sm:$0xff]
    %v231 = vld [vmem:[#allocation7 + $0x48] sm:$0xff]
    %v232 = vld [vmem:[#allocation7 + $0x50] sm:$0xff]
    %v233 = vld [vmem:[#allocation7 + $0x58] sm:$0xff]
    %v234 = vld [vmem:[#allocation7 + $0x60] sm:$0xff]
    %v235 = vld [vmem:[#allocation7 + $0x68] sm:$0xff]
    %v236 = vld [vmem:[#allocation7 + $0x70] sm:$0xff]
    %v237 = vld [vmem:[#allocation7 + $0x78] sm:$0xff]
    %v238 = vld [vmem:[#allocation7 + $0x80] sm:$0xff]
    %v239 = vld [vmem:[#allocation7 + $0x88] sm:$0xff]
    %v240 = vld [vmem:[#allocation7 + $0x90] sm:$0xff]
    %v241 = vld [vmem:[#allocation7 + $0x98] sm:$0xff]
    %v242 = vld [vmem:[#allocation7 + $0xa0] sm:$0xff]
    %v243 = vld [vmem:[#allocation7 + $0xa8] sm:$0xff]
    %v244 = vld [vmem:[#allocation7 + $0xb0] sm:$0xff]
    %v245 = vld [vmem:[#allocation7 + $0xb8] sm:$0xff]
    %v246 = vld [vmem:[#allocation7 + $0xc0] sm:$0xff]
    %v247 = vld [vmem:[#allocation7 + $0xc8] sm:$0xff]
    %v248 = vld [vmem:[#allocation7 + $0xd0] sm:$0xff]
    %v249 = vld [vmem:[#allocation7 + $0xd8] sm:$0xff]
    %v250 = vld [vmem:[#allocation7 + $0xe0] sm:$0xff]
    %v251 = vld [vmem:[#allocation7 + $0xe8] sm:$0xff]
    %v252 = vld [vmem:[#allocation7 + $0xf0] sm:$0xff]
    %v253 = vld [vmem:[#allocation7 + $0xf8] sm:$0xff]
    %s254 = scalar_lea.vmem %s6, 1
    %v255 = vld [vmem:[%s254] ss:$8 sm:$0x3]
    %v257 = vlaneseq
    %v258 = vshrl.u32 %v257, 7
    %v259 = vsub.s32 0, %v258
    %v260 = vrot.slane %v255, %v259
    %v261 = vlaneseq
    %v262 = vshrl.u32 %v261, 7
    %v263 = vsub.s32 1, %v262
    %v264 = vrot.slane %v255, %v263
    %v299 = vunpack.c.l.b16 %v222
    %v300 = vunpack.c.h.b16 %v222
    %v301 = vunpack.c.l.b16 %v223
    %v302 = vunpack.c.h.b16 %v223
    %v303 = vunpack.c.l.b16 %v224
    %v304 = vunpack.c.h.b16 %v224
    %v305 = vunpack.c.l.b16 %v225
    %v306 = vunpack.c.h.b16 %v225
    %v307 = vunpack.c.l.b16 %v226
    %v308 = vunpack.c.h.b16 %v226
    %v309 = vunpack.c.l.b16 %v227
    %v310 = vunpack.c.h.b16 %v227
    %v311 = vunpack.c.l.b16 %v228
    %v312 = vunpack.c.h.b16 %v228
    %v313 = vunpack.c.l.b16 %v229
    %v314 = vunpack.c.h.b16 %v229
    %v315 = vunpack.c.l.b16 %v230
    %v316 = vunpack.c.h.b16 %v230
    %v317 = vunpack.c.l.b16 %v231
    %v318 = vunpack.c.h.b16 %v231
    %v319 = vunpack.c.l.b16 %v232
    %v320 = vunpack.c.h.b16 %v232
    %v321 = vunpack.c.l.b16 %v233
    %v322 = vunpack.c.h.b16 %v233
    %v323 = vunpack.c.l.b16 %v234
    %v324 = vunpack.c.h.b16 %v234
    %v325 = vunpack.c.l.b16 %v235
    %v326 = vunpack.c.h.b16 %v235
    %v327 = vunpack.c.l.b16 %v236
    %v328 = vunpack.c.h.b16 %v236
    %v329 = vunpack.c.l.b16 %v237
    %v330 = vunpack.c.h.b16 %v237
    %v331 = vunpack.c.l.b16 %v238
    %v332 = vunpack.c.h.b16 %v238
    %v333 = vunpack.c.l.b16 %v239
    %v334 = vunpack.c.h.b16 %v239
    %v335 = vunpack.c.l.b16 %v240
    %v336 = vunpack.c.h.b16 %v240
    %v337 = vunpack.c.l.b16 %v241
    %v338 = vunpack.c.h.b16 %v241
    %v339 = vunpack.c.l.b16 %v242
    %v340 = vunpack.c.h.b16 %v242
    %v341 = vunpack.c.l.b16 %v243
    %v342 = vunpack.c.h.b16 %v243
    %v343 = vunpack.c.l.b16 %v244
    %v344 = vunpack.c.h.b16 %v244
    %v345 = vunpack.c.l.b16 %v245
    %v346 = vunpack.c.h.b16 %v245
    %v347 = vunpack.c.l.b16 %v246
    %v348 = vunpack.c.h.b16 %v246
    %v349 = vunpack.c.l.b16 %v247
    %v350 = vunpack.c.h.b16 %v247
    %v351 = vunpack.c.l.b16 %v248
    %v352 = vunpack.c.h.b16 %v248
    %v353 = vunpack.c.l.b16 %v249
    %v354 = vunpack.c.h.b16 %v249
    %v355 = vunpack.c.l.b16 %v250
    %v356 = vunpack.c.h.b16 %v250
    %v357 = vunpack.c.l.b16 %v251
    %v358 = vunpack.c.h.b16 %v251
    %v359 = vunpack.c.l.b16 %v252
    %v360 = vunpack.c.h.b16 %v252
    %v361 = vunpack.c.l.b16 %v253
    %v362 = vunpack.c.h.b16 %v253
    %v363 = vpack.c.b16 %v301, %v299
    %v364 = vpack.c.b16 %v302, %v300
    %v365 = vpack.c.b16 %v305, %v303
    %v366 = vpack.c.b16 %v306, %v304
    %v367 = vpack.c.b16 %v309, %v307
    %v368 = vpack.c.b16 %v310, %v308
    %v369 = vpack.c.b16 %v313, %v311
    %v370 = vpack.c.b16 %v314, %v312
    %v371 = vpack.c.b16 %v317, %v315
    %v372 = vpack.c.b16 %v318, %v316
    %v373 = vpack.c.b16 %v321, %v319
    %v374 = vpack.c.b16 %v322, %v320
    %v375 = vpack.c.b16 %v325, %v323
    %v376 = vpack.c.b16 %v326, %v324
    %v377 = vpack.c.b16 %v329, %v327
    %v378 = vpack.c.b16 %v330, %v328
    %v379 = vpack.c.b16 %v333, %v331
    %v380 = vpack.c.b16 %v334, %v332
    %v381 = vpack.c.b16 %v337, %v335
    %v382 = vpack.c.b16 %v338, %v336
    %v383 = vpack.c.b16 %v341, %v339
    %v384 = vpack.c.b16 %v342, %v340
    %v385 = vpack.c.b16 %v345, %v343
    %v386 = vpack.c.b16 %v346, %v344
    %v387 = vpack.c.b16 %v349, %v347
    %v388 = vpack.c.b16 %v350, %v348
    %v389 = vpack.c.b16 %v353, %v351
    %v390 = vpack.c.b16 %v354, %v352
    %v391 = vpack.c.b16 %v357, %v355
    %v392 = vpack.c.b16 %v358, %v356
    %v393 = vpack.c.b16 %v361, %v359
    %v394 = vpack.c.b16 %v362, %v360
    %427 = vmatprep.subr.bf16.mxu0 %v364
    %428 = vmatpush1.bf16.msra.mxu0 %v363
    %429 = vmatprep.subr.bf16.mxu0 %v366
    %430 = vmatpush1.bf16.msra.mxu0 %v365
    %431 = vmatprep.subr.bf16.mxu0 %v368
    %432 = vmatpush1.bf16.msra.mxu0 %v367
    %433 = vmatprep.subr.bf16.mxu0 %v370
    %434 = vmatpush1.bf16.msra.mxu0 %v369
    %435 = vmatprep.subr.bf16.mxu0 %v372
    %436 = vmatpush1.bf16.msra.mxu0 %v371
    %437 = vmatprep.subr.bf16.mxu0 %v374
    %438 = vmatpush1.bf16.msra.mxu0 %v373
    %439 = vmatprep.subr.bf16.mxu0 %v376
    %440 = vmatpush1.bf16.msra.mxu0 %v375
    %441 = vmatprep.subr.bf16.mxu0 %v378
    %442 = vmatpush1.bf16.msra.mxu0 %v377
    %443 = vmatprep.subr.bf16.mxu0 %v380
    %444 = vmatpush1.bf16.msra.mxu0 %v379
    %445 = vmatprep.subr.bf16.mxu0 %v382
    %446 = vmatpush1.bf16.msra.mxu0 %v381
    %447 = vmatprep.subr.bf16.mxu0 %v384
    %448 = vmatpush1.bf16.msra.mxu0 %v383
    %449 = vmatprep.subr.bf16.mxu0 %v386
    %450 = vmatpush1.bf16.msra.mxu0 %v385
    %451 = vmatprep.subr.bf16.mxu0 %v388
    %452 = vmatpush1.bf16.msra.mxu0 %v387
    %453 = vmatprep.subr.bf16.mxu0 %v390
    %454 = vmatpush1.bf16.msra.mxu0 %v389
    %455 = vmatprep.subr.bf16.mxu0 %v392
    %456 = vmatpush1.bf16.msra.mxu0 %v391
    %457 = vmatprep.subr.bf16.mxu0 %v394
    %458 = vmatpush1.bf16.msra.mxu0 %v393
    %459 = vmatprep.mubr.bf16.mxu0 %v221
    %460 = vmatmul.mubr.bf16.gmra.mrb[0].mxu0 %v220
    %v461 = vpop.f32.mrb[0].mxu0
    %v462 = vadd.f32 %v260, %v461
    %v463 = vpop.f32.mrb[0].mxu0
    %v464 = vadd.f32 %v264, %v463
    %v465 = vpop.f32.mrb[0].mxu0
    %v466 = vpop.f32.mrb[0].mxu0
    %467 = vdwg.mxu0
    %vm468 = vcmp.gt.f32.partialorder %v462, 0.0
    %vm469 = vcmp.gt.f32.partialorder %v464, 0.0
    %v470 = vmul.f32 %v462, 0.2
    %v471 = vmul.f32 %v464, 0.2
    %v472 = vsel %vm468, %v462, %v470
    %v473 = vsel %vm469, %v464, %v471
    %v474 = vpack.c.bf16 %v472, %v472
    %v475 = vpack.c.bf16 %v473, %v473
    %v476 = vld [vmem:[#allocation8] sm:$0xff]
    %v477 = vld [vmem:[#allocation8 + $0x8] sm:$0xff]
    %v478 = vld [vmem:[#allocation8 + $0x10] sm:$0xff]
    %v479 = vld [vmem:[#allocation8 + $0x18] sm:$0xff]
    %v480 = vld [vmem:[#allocation8 + $0x20] sm:$0xff]
    %v481 = vld [vmem:[#allocation8 + $0x28] sm:$0xff]
    %v482 = vld [vmem:[#allocation8 + $0x30] sm:$0xff]
    %v483 = vld [vmem:[#allocation8 + $0x38] sm:$0xff]
    %v484 = vld [vmem:[#allocation8 + $0x40] sm:$0xff]
    %v485 = vld [vmem:[#allocation8 + $0x48] sm:$0xff]
    %v486 = vld [vmem:[#allocation8 + $0x50] sm:$0xff]
    %v487 = vld [vmem:[#allocation8 + $0x58] sm:$0xff]
    %v488 = vld [vmem:[#allocation8 + $0x60] sm:$0xff]
    %v489 = vld [vmem:[#allocation8 + $0x68] sm:$0xff]
    %v490 = vld [vmem:[#allocation8 + $0x70] sm:$0xff]
    %v491 = vld [vmem:[#allocation8 + $0x78] sm:$0xff]
    %v492 = vld [vmem:[#allocation8 + $0x80] sm:$0xff]
    %v493 = vld [vmem:[#allocation8 + $0x88] sm:$0xff]
    %v494 = vld [vmem:[#allocation8 + $0x90] sm:$0xff]
    %v495 = vld [vmem:[#allocation8 + $0x98] sm:$0xff]
    %v496 = vld [vmem:[#allocation8 + $0xa0] sm:$0xff]
    %v497 = vld [vmem:[#allocation8 + $0xa8] sm:$0xff]
    %v498 = vld [vmem:[#allocation8 + $0xb0] sm:$0xff]
    %v499 = vld [vmem:[#allocation8 + $0xb8] sm:$0xff]
    %v500 = vld [vmem:[#allocation8 + $0xc0] sm:$0xff]
    %v501 = vld [vmem:[#allocation8 + $0xc8] sm:$0xff]
    %v502 = vld [vmem:[#allocation8 + $0xd0] sm:$0xff]
    %v503 = vld [vmem:[#allocation8 + $0xd8] sm:$0xff]
    %v504 = vld [vmem:[#allocation8 + $0xe0] sm:$0xff]
    %v505 = vld [vmem:[#allocation8 + $0xe8] sm:$0xff]
    %v506 = vld [vmem:[#allocation8 + $0xf0] sm:$0xff]
    %v507 = vld [vmem:[#allocation8 + $0xf8] sm:$0xff]
    %s508 = scalar_lea.vmem %s6, 2
    %v509 = vld [vmem:[%s508] ss:$8 sm:$0x3]
    %v511 = vlaneseq
    %v512 = vshrl.u32 %v511, 7
    %v513 = vsub.s32 0, %v512
    %v514 = vrot.slane %v509, %v513
    %v515 = vlaneseq
    %v516 = vshrl.u32 %v515, 7
    %v517 = vsub.s32 1, %v516
    %v518 = vrot.slane %v509, %v517
    %v553 = vunpack.c.l.b16 %v476
    %v554 = vunpack.c.h.b16 %v476
    %v555 = vunpack.c.l.b16 %v477
    %v556 = vunpack.c.h.b16 %v477
    %v557 = vunpack.c.l.b16 %v478
    %v558 = vunpack.c.h.b16 %v478
    %v559 = vunpack.c.l.b16 %v479
    %v560 = vunpack.c.h.b16 %v479
    %v561 = vunpack.c.l.b16 %v480
    %v562 = vunpack.c.h.b16 %v480
    %v563 = vunpack.c.l.b16 %v481
    %v564 = vunpack.c.h.b16 %v481
    %v565 = vunpack.c.l.b16 %v482
    %v566 = vunpack.c.h.b16 %v482
    %v567 = vunpack.c.l.b16 %v483
    %v568 = vunpack.c.h.b16 %v483
    %v569 = vunpack.c.l.b16 %v484
    %v570 = vunpack.c.h.b16 %v484
    %v571 = vunpack.c.l.b16 %v485
    %v572 = vunpack.c.h.b16 %v485
    %v573 = vunpack.c.l.b16 %v486
    %v574 = vunpack.c.h.b16 %v486
    %v575 = vunpack.c.l.b16 %v487
    %v576 = vunpack.c.h.b16 %v487
    %v577 = vunpack.c.l.b16 %v488
    %v578 = vunpack.c.h.b16 %v488
    %v579 = vunpack.c.l.b16 %v489
    %v580 = vunpack.c.h.b16 %v489
    %v581 = vunpack.c.l.b16 %v490
    %v582 = vunpack.c.h.b16 %v490
    %v583 = vunpack.c.l.b16 %v491
    %v584 = vunpack.c.h.b16 %v491
    %v585 = vunpack.c.l.b16 %v492
    %v586 = vunpack.c.h.b16 %v492
    %v587 = vunpack.c.l.b16 %v493
    %v588 = vunpack.c.h.b16 %v493
    %v589 = vunpack.c.l.b16 %v494
    %v590 = vunpack.c.h.b16 %v494
    %v591 = vunpack.c.l.b16 %v495
    %v592 = vunpack.c.h.b16 %v495
    %v593 = vunpack.c.l.b16 %v496
    %v594 = vunpack.c.h.b16 %v496
    %v595 = vunpack.c.l.b16 %v497
    %v596 = vunpack.c.h.b16 %v497
    %v597 = vunpack.c.l.b16 %v498
    %v598 = vunpack.c.h.b16 %v498
    %v599 = vunpack.c.l.b16 %v499
    %v600 = vunpack.c.h.b16 %v499
    %v601 = vunpack.c.l.b16 %v500
    %v602 = vunpack.c.h.b16 %v500
    %v603 = vunpack.c.l.b16 %v501
    %v604 = vunpack.c.h.b16 %v501
    %v605 = vunpack.c.l.b16 %v502
    %v606 = vunpack.c.h.b16 %v502
    %v607 = vunpack.c.l.b16 %v503
    %v608 = vunpack.c.h.b16 %v503
    %v609 = vunpack.c.l.b16 %v504
    %v610 = vunpack.c.h.b16 %v504
    %v611 = vunpack.c.l.b16 %v505
    %v612 = vunpack.c.h.b16 %v505
    %v613 = vunpack.c.l.b16 %v506
    %v614 = vunpack.c.h.b16 %v506
    %v615 = vunpack.c.l.b16 %v507
    %v616 = vunpack.c.h.b16 %v507
    %v617 = vpack.c.b16 %v555, %v553
    %v618 = vpack.c.b16 %v556, %v554
    %v619 = vpack.c.b16 %v559, %v557
    %v620 = vpack.c.b16 %v560, %v558
    %v621 = vpack.c.b16 %v563, %v561
    %v622 = vpack.c.b16 %v564, %v562
    %v623 = vpack.c.b16 %v567, %v565
    %v624 = vpack.c.b16 %v568, %v566
    %v625 = vpack.c.b16 %v571, %v569
    %v626 = vpack.c.b16 %v572, %v570
    %v627 = vpack.c.b16 %v575, %v573
    %v628 = vpack.c.b16 %v576, %v574
    %v629 = vpack.c.b16 %v579, %v577
    %v630 = vpack.c.b16 %v580, %v578
    %v631 = vpack.c.b16 %v583, %v581
    %v632 = vpack.c.b16 %v584, %v582
    %v633 = vpack.c.b16 %v587, %v585
    %v634 = vpack.c.b16 %v588, %v586
    %v635 = vpack.c.b16 %v591, %v589
    %v636 = vpack.c.b16 %v592, %v590
    %v637 = vpack.c.b16 %v595, %v593
    %v638 = vpack.c.b16 %v596, %v594
    %v639 = vpack.c.b16 %v599, %v597
    %v640 = vpack.c.b16 %v600, %v598
    %v641 = vpack.c.b16 %v603, %v601
    %v642 = vpack.c.b16 %v604, %v602
    %v643 = vpack.c.b16 %v607, %v605
    %v644 = vpack.c.b16 %v608, %v606
    %v645 = vpack.c.b16 %v611, %v609
    %v646 = vpack.c.b16 %v612, %v610
    %v647 = vpack.c.b16 %v615, %v613
    %v648 = vpack.c.b16 %v616, %v614
    %681 = vmatprep.subr.bf16.mxu0 %v618
    %682 = vmatpush1.bf16.msra.mxu0 %v617
    %683 = vmatprep.subr.bf16.mxu0 %v620
    %684 = vmatpush1.bf16.msra.mxu0 %v619
    %685 = vmatprep.subr.bf16.mxu0 %v622
    %686 = vmatpush1.bf16.msra.mxu0 %v621
    %687 = vmatprep.subr.bf16.mxu0 %v624
    %688 = vmatpush1.bf16.msra.mxu0 %v623
    %689 = vmatprep.subr.bf16.mxu0 %v626
    %690 = vmatpush1.bf16.msra.mxu0 %v625
    %691 = vmatprep.subr.bf16.mxu0 %v628
    %692 = vmatpush1.bf16.msra.mxu0 %v627
    %693 = vmatprep.subr.bf16.mxu0 %v630
    %694 = vmatpush1.bf16.msra.mxu0 %v629
    %695 = vmatprep.subr.bf16.mxu0 %v632
    %696 = vmatpush1.bf16.msra.mxu0 %v631
    %697 = vmatprep.subr.bf16.mxu0 %v634
    %698 = vmatpush1.bf16.msra.mxu0 %v633
    %699 = vmatprep.subr.bf16.mxu0 %v636
    %700 = vmatpush1.bf16.msra.mxu0 %v635
    %701 = vmatprep.subr.bf16.mxu0 %v638
    %702 = vmatpush1.bf16.msra.mxu0 %v637
    %703 = vmatprep.subr.bf16.mxu0 %v640
    %704 = vmatpush1.bf16.msra.mxu0 %v639
    %705 = vmatprep.subr.bf16.mxu0 %v642
    %706 = vmatpush1.bf16.msra.mxu0 %v641
    %707 = vmatprep.subr.bf16.mxu0 %v644
    %708 = vmatpush1.bf16.msra.mxu0 %v643
    %709 = vmatprep.subr.bf16.mxu0 %v646
    %710 = vmatpush1.bf16.msra.mxu0 %v645
    %711 = vmatprep.subr.bf16.mxu0 %v648
    %712 = vmatpush1.bf16.msra.mxu0 %v647
    %713 = vmatprep.mubr.bf16.mxu0 %v475
    %714 = vmatmul.mubr.bf16.gmra.mrb[0].mxu0 %v474
    %v715 = vpop.f32.mrb[0].mxu0
    %v716 = vadd.f32 %v514, %v715
    %v717 = vpop.f32.mrb[0].mxu0
    %v718 = vadd.f32 %v518, %v717
    %v719 = vpop.f32.mrb[0].mxu0
    %v720 = vpop.f32.mrb[0].mxu0
    %721 = vdwg.mxu0
    %vm722 = vcmp.gt.f32.partialorder %v716, 0.0
    %vm723 = vcmp.gt.f32.partialorder %v718, 0.0
    %v724 = vmul.f32 %v716, 0.2
    %v725 = vmul.f32 %v718, 0.2
    %v726 = vsel %vm722, %v716, %v724
    %v727 = vsel %vm723, %v718, %v725
    %v728 = vpack.c.bf16 %v726, %v726
    %v729 = vpack.c.bf16 %v727, %v727
    %v730 = vld [vmem:[#allocation10] sm:$0xff]
    %v731 = vld [vmem:[#allocation10 + $0x8] sm:$0xff]
    %v732 = vld [vmem:[#allocation10 + $0x10] sm:$0xff]
    %v733 = vld [vmem:[#allocation10 + $0x18] sm:$0xff]
    %v734 = vld [vmem:[#allocation10 + $0x20] sm:$0xff]
    %v735 = vld [vmem:[#allocation10 + $0x28] sm:$0xff]
    %v736 = vld [vmem:[#allocation10 + $0x30] sm:$0xff]
    %v737 = vld [vmem:[#allocation10 + $0x38] sm:$0xff]
    %v738 = vld [vmem:[#allocation10 + $0x40] sm:$0xff]
    %v739 = vld [vmem:[#allocation10 + $0x48] sm:$0xff]
    %v740 = vld [vmem:[#allocation10 + $0x50] sm:$0xff]
    %v741 = vld [vmem:[#allocation10 + $0x58] sm:$0xff]
    %v742 = vld [vmem:[#allocation10 + $0x60] sm:$0xff]
    %v743 = vld [vmem:[#allocation10 + $0x68] sm:$0xff]
    %v744 = vld [vmem:[#allocation10 + $0x70] sm:$0xff]
    %v745 = vld [vmem:[#allocation10 + $0x78] sm:$0xff]
    %v746 = vld [vmem:[#allocation10 + $0x80] sm:$0xff]
    %v747 = vld [vmem:[#allocation10 + $0x88] sm:$0xff]
    %v748 = vld [vmem:[#allocation10 + $0x90] sm:$0xff]
    %v749 = vld [vmem:[#allocation10 + $0x98] sm:$0xff]
    %v750 = vld [vmem:[#allocation10 + $0xa0] sm:$0xff]
    %v751 = vld [vmem:[#allocation10 + $0xa8] sm:$0xff]
    %v752 = vld [vmem:[#allocation10 + $0xb0] sm:$0xff]
    %v753 = vld [vmem:[#allocation10 + $0xb8] sm:$0xff]
    %v754 = vld [vmem:[#allocation10 + $0xc0] sm:$0xff]
    %v755 = vld [vmem:[#allocation10 + $0xc8] sm:$0xff]
    %v756 = vld [vmem:[#allocation10 + $0xd0] sm:$0xff]
    %v757 = vld [vmem:[#allocation10 + $0xd8] sm:$0xff]
    %v758 = vld [vmem:[#allocation10 + $0xe0] sm:$0xff]
    %v759 = vld [vmem:[#allocation10 + $0xe8] sm:$0xff]
    %v760 = vld [vmem:[#allocation10 + $0xf0] sm:$0xff]
    %v761 = vld [vmem:[#allocation10 + $0xf8] sm:$0xff]
    %s762 = scalar_lea.vmem %s6, 3
    %v763 = vld [vmem:[%s762] ss:$8 sm:$0x3]
    %v765 = vlaneseq
    %v766 = vshrl.u32 %v765, 7
    %v767 = vsub.s32 0, %v766
    %v768 = vrot.slane %v763, %v767
    %v769 = vlaneseq
    %v770 = vshrl.u32 %v769, 7
    %v771 = vsub.s32 1, %v770
    %v772 = vrot.slane %v763, %v771
    %v807 = vunpack.c.l.b16 %v730
    %v808 = vunpack.c.h.b16 %v730
    %v809 = vunpack.c.l.b16 %v731
    %v810 = vunpack.c.h.b16 %v731
    %v811 = vunpack.c.l.b16 %v732
    %v812 = vunpack.c.h.b16 %v732
    %v813 = vunpack.c.l.b16 %v733
    %v814 = vunpack.c.h.b16 %v733
    %v815 = vunpack.c.l.b16 %v734
    %v816 = vunpack.c.h.b16 %v734
    %v817 = vunpack.c.l.b16 %v735
    %v818 = vunpack.c.h.b16 %v735
    %v819 = vunpack.c.l.b16 %v736
    %v820 = vunpack.c.h.b16 %v736
    %v821 = vunpack.c.l.b16 %v737
    %v822 = vunpack.c.h.b16 %v737
    %v823 = vunpack.c.l.b16 %v738
    %v824 = vunpack.c.h.b16 %v738
    %v825 = vunpack.c.l.b16 %v739
    %v826 = vunpack.c.h.b16 %v739
    %v827 = vunpack.c.l.b16 %v740
    %v828 = vunpack.c.h.b16 %v740
    %v829 = vunpack.c.l.b16 %v741
    %v830 = vunpack.c.h.b16 %v741
    %v831 = vunpack.c.l.b16 %v742
    %v832 = vunpack.c.h.b16 %v742
    %v833 = vunpack.c.l.b16 %v743
    %v834 = vunpack.c.h.b16 %v743
    %v835 = vunpack.c.l.b16 %v744
    %v836 = vunpack.c.h.b16 %v744
    %v837 = vunpack.c.l.b16 %v745
    %v838 = vunpack.c.h.b16 %v745
    %v839 = vunpack.c.l.b16 %v746
    %v840 = vunpack.c.h.b16 %v746
    %v841 = vunpack.c.l.b16 %v747
    %v842 = vunpack.c.h.b16 %v747
    %v843 = vunpack.c.l.b16 %v748
    %v844 = vunpack.c.h.b16 %v748
    %v845 = vunpack.c.l.b16 %v749
    %v846 = vunpack.c.h.b16 %v749
    %v847 = vunpack.c.l.b16 %v750
    %v848 = vunpack.c.h.b16 %v750
    %v849 = vunpack.c.l.b16 %v751
    %v850 = vunpack.c.h.b16 %v751
    %v851 = vunpack.c.l.b16 %v752
    %v852 = vunpack.c.h.b16 %v752
    %v853 = vunpack.c.l.b16 %v753
    %v854 = vunpack.c.h.b16 %v753
    %v855 = vunpack.c.l.b16 %v754
    %v856 = vunpack.c.h.b16 %v754
    %v857 = vunpack.c.l.b16 %v755
    %v858 = vunpack.c.h.b16 %v755
    %v859 = vunpack.c.l.b16 %v756
    %v860 = vunpack.c.h.b16 %v756
    %v861 = vunpack.c.l.b16 %v757
    %v862 = vunpack.c.h.b16 %v757
    %v863 = vunpack.c.l.b16 %v758
    %v864 = vunpack.c.h.b16 %v758
    %v865 = vunpack.c.l.b16 %v759
    %v866 = vunpack.c.h.b16 %v759
    %v867 = vunpack.c.l.b16 %v760
    %v868 = vunpack.c.h.b16 %v760
    %v869 = vunpack.c.l.b16 %v761
    %v870 = vunpack.c.h.b16 %v761
    %v871 = vpack.c.b16 %v809, %v807
    %v872 = vpack.c.b16 %v810, %v808
    %v873 = vpack.c.b16 %v813, %v811
    %v874 = vpack.c.b16 %v814, %v812
    %v875 = vpack.c.b16 %v817, %v815
    %v876 = vpack.c.b16 %v818, %v816
    %v877 = vpack.c.b16 %v821, %v819
    %v878 = vpack.c.b16 %v822, %v820
    %v879 = vpack.c.b16 %v825, %v823
    %v880 = vpack.c.b16 %v826, %v824
    %v881 = vpack.c.b16 %v829, %v827
    %v882 = vpack.c.b16 %v830, %v828
    %v883 = vpack.c.b16 %v833, %v831
    %v884 = vpack.c.b16 %v834, %v832
    %v885 = vpack.c.b16 %v837, %v835
    %v886 = vpack.c.b16 %v838, %v836
    %v887 = vpack.c.b16 %v841, %v839
    %v888 = vpack.c.b16 %v842, %v840
    %v889 = vpack.c.b16 %v845, %v843
    %v890 = vpack.c.b16 %v846, %v844
    %v891 = vpack.c.b16 %v849, %v847
    %v892 = vpack.c.b16 %v850, %v848
    %v893 = vpack.c.b16 %v853, %v851
    %v894 = vpack.c.b16 %v854, %v852
    %v895 = vpack.c.b16 %v857, %v855
    %v896 = vpack.c.b16 %v858, %v856
    %v897 = vpack.c.b16 %v861, %v859
    %v898 = vpack.c.b16 %v862, %v860
    %v899 = vpack.c.b16 %v865, %v863
    %v900 = vpack.c.b16 %v866, %v864
    %v901 = vpack.c.b16 %v869, %v867
    %v902 = vpack.c.b16 %v870, %v868
    %935 = vmatprep.subr.bf16.mxu0 %v872
    %936 = vmatpush1.bf16.msra.mxu0 %v871
    %937 = vmatprep.subr.bf16.mxu0 %v874
    %938 = vmatpush1.bf16.msra.mxu0 %v873
    %939 = vmatprep.subr.bf16.mxu0 %v876
    %940 = vmatpush1.bf16.msra.mxu0 %v875
    %941 = vmatprep.subr.bf16.mxu0 %v878
    %942 = vmatpush1.bf16.msra.mxu0 %v877
    %943 = vmatprep.subr.bf16.mxu0 %v880
    %944 = vmatpush1.bf16.msra.mxu0 %v879
    %945 = vmatprep.subr.bf16.mxu0 %v882
    %946 = vmatpush1.bf16.msra.mxu0 %v881
    %947 = vmatprep.subr.bf16.mxu0 %v884
    %948 = vmatpush1.bf16.msra.mxu0 %v883
    %949 = vmatprep.subr.bf16.mxu0 %v886
    %950 = vmatpush1.bf16.msra.mxu0 %v885
    %951 = vmatprep.subr.bf16.mxu0 %v888
    %952 = vmatpush1.bf16.msra.mxu0 %v887
    %953 = vmatprep.subr.bf16.mxu0 %v890
    %954 = vmatpush1.bf16.msra.mxu0 %v889
    %955 = vmatprep.subr.bf16.mxu0 %v892
    %956 = vmatpush1.bf16.msra.mxu0 %v891
    %957 = vmatprep.subr.bf16.mxu0 %v894
    %958 = vmatpush1.bf16.msra.mxu0 %v893
    %959 = vmatprep.subr.bf16.mxu0 %v896
    %960 = vmatpush1.bf16.msra.mxu0 %v895
    %961 = vmatprep.subr.bf16.mxu0 %v898
    %962 = vmatpush1.bf16.msra.mxu0 %v897
    %963 = vmatprep.subr.bf16.mxu0 %v900
    %964 = vmatpush1.bf16.msra.mxu0 %v899
    %965 = vmatprep.subr.bf16.mxu0 %v902
    %966 = vmatpush1.bf16.msra.mxu0 %v901
    %967 = vmatprep.mubr.bf16.mxu0 %v729
    %968 = vmatmul.mubr.bf16.gmra.mrb[0].mxu0 %v728
    %v969 = vpop.f32.mrb[0].mxu0
    %v970 = vadd.f32 %v768, %v969
    %v971 = vpop.f32.mrb[0].mxu0
    %v972 = vadd.f32 %v772, %v971
    %v973 = vpop.f32.mrb[0].mxu0
    %v974 = vpop.f32.mrb[0].mxu0
    %975 = vdwg.mxu0
    %vm976 = vcmp.gt.f32.partialorder %v970, 0.0
    %vm977 = vcmp.gt.f32.partialorder %v972, 0.0
    %v978 = vmul.f32 %v970, 0.2
    %v979 = vmul.f32 %v972, 0.2
    %v980 = vsel %vm976, %v970, %v978
    %v981 = vsel %vm977, %v972, %v979
    %v982 = vpack.c.bf16 %v980, %v980
    %v983 = vpack.c.bf16 %v981, %v981
    %v984 = vld [vmem:[#allocation11] sm:$0xf]
    %v985 = vld [vmem:[#allocation11 + $0x4] sm:$0xf]
    %v986 = vld [vmem:[#allocation11 + $0x8] sm:$0xf]
    %v987 = vld [vmem:[#allocation11 + $0xc] sm:$0xf]
    %v988 = vld [vmem:[#allocation11 + $0x10] sm:$0xf]
    %v989 = vld [vmem:[#allocation11 + $0x14] sm:$0xf]
    %v990 = vld [vmem:[#allocation11 + $0x18] sm:$0xf]
    %v991 = vld [vmem:[#allocation11 + $0x1c] sm:$0xf]
    %v992 = vld [vmem:[#allocation11 + $0x20] sm:$0xf]
    %v993 = vld [vmem:[#allocation11 + $0x24] sm:$0xf]
    %v994 = vld [vmem:[#allocation11 + $0x28] sm:$0xf]
    %v995 = vld [vmem:[#allocation11 + $0x2c] sm:$0xf]
    %v996 = vld [vmem:[#allocation11 + $0x30] sm:$0xf]
    %v997 = vld [vmem:[#allocation11 + $0x34] sm:$0xf]
    %v998 = vld [vmem:[#allocation11 + $0x38] sm:$0xf]
    %v999 = vld [vmem:[#allocation11 + $0x3c] sm:$0xf]
    %v1000 = vld [vmem:[#allocation11 + $0x40] sm:$0xf]
    %v1001 = vld [vmem:[#allocation11 + $0x44] sm:$0xf]
    %v1002 = vld [vmem:[#allocation11 + $0x48] sm:$0xf]
    %v1003 = vld [vmem:[#allocation11 + $0x4c] sm:$0xf]
    %v1004 = vld [vmem:[#allocation11 + $0x50] sm:$0xf]
    %v1005 = vld [vmem:[#allocation11 + $0x54] sm:$0xf]
    %v1006 = vld [vmem:[#allocation11 + $0x58] sm:$0xf]
    %v1007 = vld [vmem:[#allocation11 + $0x5c] sm:$0xf]
    %v1008 = vld [vmem:[#allocation11 + $0x60] sm:$0xf]
    %v1009 = vld [vmem:[#allocation11 + $0x64] sm:$0xf]
    %v1010 = vld [vmem:[#allocation11 + $0x68] sm:$0xf]
    %v1011 = vld [vmem:[#allocation11 + $0x6c] sm:$0xf]
    %v1012 = vld [vmem:[#allocation11 + $0x70] sm:$0xf]
    %v1013 = vld [vmem:[#allocation11 + $0x74] sm:$0xf]
    %v1014 = vld [vmem:[#allocation11 + $0x78] sm:$0xf]
    %v1015 = vld [vmem:[#allocation11 + $0x7c] sm:$0xf]
    %v1016 = vld [vmem:[%s6 + $0x4] ss:$0 sm:$0xff]
    %v1049 = vunpack.c.l.b16 %v984
    %v1050 = vunpack.c.l.b16 %v985
    %v1051 = vunpack.c.l.b16 %v986
    %v1052 = vunpack.c.l.b16 %v987
    %v1053 = vunpack.c.l.b16 %v988
    %v1054 = vunpack.c.l.b16 %v989
    %v1055 = vunpack.c.l.b16 %v990
    %v1056 = vunpack.c.l.b16 %v991
    %v1057 = vunpack.c.l.b16 %v992
    %v1058 = vunpack.c.l.b16 %v993
    %v1059 = vunpack.c.l.b16 %v994
    %v1060 = vunpack.c.l.b16 %v995
    %v1061 = vunpack.c.l.b16 %v996
    %v1062 = vunpack.c.l.b16 %v997
    %v1063 = vunpack.c.l.b16 %v998
    %v1064 = vunpack.c.l.b16 %v999
    %v1065 = vunpack.c.l.b16 %v1000
    %v1066 = vunpack.c.l.b16 %v1001
    %v1067 = vunpack.c.l.b16 %v1002
    %v1068 = vunpack.c.l.b16 %v1003
    %v1069 = vunpack.c.l.b16 %v1004
    %v1070 = vunpack.c.l.b16 %v1005
    %v1071 = vunpack.c.l.b16 %v1006
    %v1072 = vunpack.c.l.b16 %v1007
    %v1073 = vunpack.c.l.b16 %v1008
    %v1074 = vunpack.c.l.b16 %v1009
    %v1075 = vunpack.c.l.b16 %v1010
    %v1076 = vunpack.c.l.b16 %v1011
    %v1077 = vunpack.c.l.b16 %v1012
    %v1078 = vunpack.c.l.b16 %v1013
    %v1079 = vunpack.c.l.b16 %v1014
    %v1080 = vunpack.c.l.b16 %v1015
    %v1081 = vpack.c.b16 %v1050, %v1049
    %v1082 = vpack.c.b16 %v1052, %v1051
    %v1083 = vpack.c.b16 %v1054, %v1053
    %v1084 = vpack.c.b16 %v1056, %v1055
    %v1085 = vpack.c.b16 %v1058, %v1057
    %v1086 = vpack.c.b16 %v1060, %v1059
    %v1087 = vpack.c.b16 %v1062, %v1061
    %v1088 = vpack.c.b16 %v1064, %v1063
    %v1089 = vpack.c.b16 %v1066, %v1065
    %v1090 = vpack.c.b16 %v1068, %v1067
    %v1091 = vpack.c.b16 %v1070, %v1069
    %v1092 = vpack.c.b16 %v1072, %v1071
    %v1093 = vpack.c.b16 %v1074, %v1073
    %v1094 = vpack.c.b16 %v1076, %v1075
    %v1095 = vpack.c.b16 %v1078, %v1077
    %v1096 = vpack.c.b16 %v1080, %v1079
    %1113 = vmatprep.subr.bf16.mxu0 0
    %1114 = vmatpush1.bf16.msra.mxu0 %v1081
    %1115 = vmatprep.subr.bf16.mxu0 0
    %1116 = vmatpush1.bf16.msra.mxu0 %v1082
    %1117 = vmatprep.subr.bf16.mxu0 0
    %1118 = vmatpush1.bf16.msra.mxu0 %v1083
    %1119 = vmatprep.subr.bf16.mxu0 0
    %1120 = vmatpush1.bf16.msra.mxu0 %v1084
    %1121 = vmatprep.subr.bf16.mxu0 0
    %1122 = vmatpush1.bf16.msra.mxu0 %v1085
    %1123 = vmatprep.subr.bf16.mxu0 0
    %1124 = vmatpush1.bf16.msra.mxu0 %v1086
    %1125 = vmatprep.subr.bf16.mxu0 0
    %1126 = vmatpush1.bf16.msra.mxu0 %v1087
    %1127 = vmatprep.subr.bf16.mxu0 0
    %1128 = vmatpush1.bf16.msra.mxu0 %v1088
    %1129 = vmatprep.subr.bf16.mxu0 0
    %1130 = vmatpush1.bf16.msra.mxu0 %v1089
    %1131 = vmatprep.subr.bf16.mxu0 0
    %1132 = vmatpush1.bf16.msra.mxu0 %v1090
    %1133 = vmatprep.subr.bf16.mxu0 0
    %1134 = vmatpush1.bf16.msra.mxu0 %v1091
    %1135 = vmatprep.subr.bf16.mxu0 0
    %1136 = vmatpush1.bf16.msra.mxu0 %v1092
    %1137 = vmatprep.subr.bf16.mxu0 0
    %1138 = vmatpush1.bf16.msra.mxu0 %v1093
    %1139 = vmatprep.subr.bf16.mxu0 0
    %1140 = vmatpush1.bf16.msra.mxu0 %v1094
    %1141 = vmatprep.subr.bf16.mxu0 0
    %1142 = vmatpush1.bf16.msra.mxu0 %v1095
    %1143 = vmatprep.subr.bf16.mxu0 0
    %1144 = vmatpush1.bf16.msra.mxu0 %v1096
    %1145 = vmatprep.mubr.bf16.mxu0 %v983
    %1146 = vmatmul.mubr.bf16.gmra.mrb[0].mxu0 %v982
    %v1147 = vpop.f32.mrb[0].mxu0
    %v1148 = vadd.f32 %v1016, %v1147
    %v1149 = vpop.f32.mrb[0].mxu0
    %v1150 = vpop.f32.mrb[0].mxu0
    %v1151 = vpop.f32.mrb[0].mxu0
    %1152 = vdwg.mxu0
    %1153 = vst [vmem:[#allocation13] sm:$0xff] %v1148
    // Predicated region
    $region54: #{tpu_custom_call.1} parent=1 // pred_check
      _
    $region55: #{tpu_custom_call.1} parent=1 // pred_check_branch
      %1155 = sbr.rel (0) target = $region57
    $region56: #{tpu_custom_call.1} parent=1 // pred_region
      %s1157 = ssub.s32 128, 128
      %1158 = vsyncadd [#allocation4], %s1157
      %s1160 = sshll.u32 [#allocation13], 4
      %s1161 = int_to_ptr.vmem [resolvable:$true] %s1160
      %1163 = dma.vmem_to_hbm [thread:$0]  %s1161, 128, %s7, [#allocation4]
    $region57: #{tpu_custom_call.1} parent=1 // pred_fallthru
      _
    // Predicated region
    $region58: #{tpu_custom_call.1} parent=1 // pred_check
      _
    $region59: #{tpu_custom_call.1} parent=1 // pred_check_branch
      %1165 = sbr.rel (0) target = $region61
    $region60: #{tpu_custom_call.1} parent=1 // pred_region
      %1166 = dma.done [#allocation4], 128
    $region61: #{tpu_custom_call.1} parent=1 // pred_fallthru
      _
    %1167 = vsyncpa [#allocation3], 1
    %1168 = vsyncpa [#allocation6], 1
    %1169 = vsyncpa [#allocation9], 1
    %1170 = vsyncpa [#allocation12], 1
    %1171 = vsyncpa [#allocation4], 1

// kernel: tpu_custom_call.1
$region0: #{tpu_custom_call.1}
  #allocation0 [shape = 'u32[]', space=smem, size = 0x4, offset = 0x4, fixed_abs, tag = 'smem constant byte address 0x4 - core index']
  #allocation1 [shape = 'u32[144,128]{1,0:T(1,128)}', space=vmem, size = 0x12000, scoped, tag = 'internal scratch']
  %s0 = inlined_call_operand.hbm [shape: bf16[8,64], index: 0, kind: input, shape index: {}]
  %s1 = inlined_call_operand.hbm [shape: bf16[64,256], index: 1, kind: input, shape index: {}]
  %s2 = inlined_call_operand.hbm [shape: bf16[256,256], index: 2, kind: input, shape index: {}]
  %s3 = inlined_call_operand.hbm [shape: bf16[256,256], index: 3, kind: input, shape index: {}]
  %s4 = inlined_call_operand.hbm [shape: bf16[256,256], index: 4, kind: input, shape index: {}]
  %s5 = inlined_call_operand.hbm [shape: bf16[256,128], index: 5, kind: input, shape index: {}]
  %s6 = inlined_call_operand.vmem [shape: f32[8,256], index: 6, kind: input, shape index: {}]
  %s7 = inlined_call_operand.hbm [shape: f32[8,128], index: 7, kind: output, shape index: {}]
  %s8 = sld [smem:[#allocation0]]
  $region62: #{tpu_custom_call.1} parent=0
    _
  %s10 = ssub.s32 1, %s8
  %s11 = scalar_select 0, %s10, %s8
  $region1: #{tpu_custom_call.1} parent=0
    #allocation2 [shape = 'u8[2048]{0}', space=vmem, size = 0x800, scoped, tag = 'input window, operand 0, single buffered']
    #allocation3 [shape = 's32[1]{0}', space=sflag, size = 0x4, scoped, tag = 'scoped memory for tpu_custom_call.1']
    #allocation4 [shape = 's32[1]{0}', space=sflag, size = 0x4, scoped, tag = 'scoped memory for tpu_custom_call.1']
    #allocation5 [shape = 'u8[32768]{0}', space=vmem, size = 0x8000, scoped, tag = 'input window, operand 1, single buffered']
    #allocation6 [shape = 's32[1]{0}', space=sflag, size = 0x4, scoped, tag = 'scoped memory for tpu_custom_call.1']
    #allocation7 [shape = 'u8[131072]{0}', space=vmem, size = 0x20000, scoped, tag = 'input window, operand 2, single buffered']
    #allocation8 [shape = 'u8[131072]{0}', space=vmem, size = 0x20000, scoped, tag = 'input window, operand 3, single buffered']
    #allocation9 [shape = 's32[1]{0}', space=sflag, size = 0x4, scoped, tag = 'scoped memory for tpu_custom_call.1']
    #allocation10 [shape = 'u8[131072]{0}', space=vmem, size = 0x20000, scoped, tag = 'input window, operand 4, single buffered']
    #allocation11 [shape = 'u8[65536]{0}', space=vmem, size = 0x10000, scoped, tag = 'input window, operand 5, single buffered']
    #allocation12 [shape = 's32[1]{0}', space=sflag, size = 0x4, scoped, tag = 'scoped memory for tpu_custom_call.1']
    #allocation13 [shape = 'u8[4096]{0}', space=vmem, size = 0x1000, scoped, tag = 'output window, operand 0, single buffered']
    %12 = vsyncpa [#allocation3], 0
    %13 = vsyncpa [#allocation6], 0
    %14 = vsyncpa [#allocation9], 0
    %15 = vsyncpa [#allocation12], 0
    %16 = vsyncpa [#allocation4], 0
    // Predicated region
    $region2: #{tpu_custom_call.1} parent=1 // pred_check
      _
    $region3: #{tpu_custom_call.1} parent=1 // pred_check_branch
      %18 = sbr.rel (0) target = $region5
    $region4: #{tpu_custom_call.1} parent=1 // pred_region
      %s20 = ssub.s32 64, 64
      %21 = vsyncadd [#allocation3], %s20
      %s23 = sshll.u32 [#allocation2], 4
      %s24 = int_to_ptr.vmem [resolvable:$true] %s23
      %26 = dma.hbm_to_vmem [thread:$0]  %s0, 64, %s24, [#allocation3]
    $region5: #{tpu_custom_call.1} parent=1 // pred_fallthru
      _
    // Predicated region
    $region6: #{tpu_custom_call.1} parent=1 // pred_check
      _
    $region7: #{tpu_custom_call.1} parent=1 // pred_check_branch
      %28 = sbr.rel (0) target = $region9
    $region8: #{tpu_custom_call.1} parent=1 // pred_region
      %s30 = ssub.s32 1024, 1024
      %31 = vsyncadd [#allocation6], %s30
      %s32 = sshll.u32 [#allocation5], 4
      %s33 = int_to_ptr.vmem [resolvable:$true] %s32
      %38 = dma.hbm_to_vmem [thread:$0]  %s1, 1024, %s33, [#allocation6], 128, 128, 8
    $region9: #{tpu_custom_call.1} parent=1 // pred_fallthru
      _
    // Predicated region
    $region10: #{tpu_custom_call.1} parent=1 // pred_check
      _
    $region11: #{tpu_custom_call.1} parent=1 // pred_check_branch
      %40 = sbr.rel (0) target = $region13
    $region12: #{tpu_custom_call.1} parent=1 // pred_region
      %s42 = ssub.s32 4096, 4096
      %43 = vsyncadd [#allocation6], %s42
      %s44 = sshll.u32 [#allocation7], 4
      %s45 = int_to_ptr.vmem [resolvable:$true] %s44
      %50 = dma.hbm_to_vmem [thread:$0]  %s2, 4096, %s45, [#allocation6], 128, 128, 8
    $region13: #{tpu_custom_call.1} parent=1 // pred_fallthru
      _
    // Predicated region
    $region14: #{tpu_custom_call.1} parent=1 // pred_check
      _
    $region15: #{tpu_custom_call.1} parent=1 // pred_check_branch
      %52 = sbr.rel (0) target = $region17
    $region16: #{tpu_custom_call.1} parent=1 // pred_region
      %s54 = ssub.s32 4096, 4096
      %55 = vsyncadd [#allocation9], %s54
      %s56 = sshll.u32 [#allocation8], 4
      %s57 = int_to_ptr.vmem [resolvable:$true] %s56
      %62 = dma.hbm_to_vmem [thread:$0]  %s3, 4096, %s57, [#allocation9], 128, 128, 8
    $region17: #{tpu_custom_call.1} parent=1 // pred_fallthru
      _
    // Predicated region
    $region18: #{tpu_custom_call.1} parent=1 // pred_check
      _
    $region19: #{tpu_custom_call.1} parent=1 // pred_check_branch
      %64 = sbr.rel (0) target = $region21
    $region20: #{tpu_custom_call.1} parent=1 // pred_region
      %s66 = ssub.s32 4096, 4096
      %67 = vsyncadd [#allocation9], %s66
      %s68 = sshll.u32 [#allocation10], 4
      %s69 = int_to_ptr.vmem [resolvable:$true] %s68
      %74 = dma.hbm_to_vmem [thread:$0]  %s4, 4096, %s69, [#allocation9], 128, 128, 8
    $region21: #{tpu_custom_call.1} parent=1 // pred_fallthru
      _
    // Predicated region
    $region22: #{tpu_custom_call.1} parent=1 // pred_check
      _
    $region23: #{tpu_custom_call.1} parent=1 // pred_check_branch
      %76 = sbr.rel (0) target = $region25
    $region24: #{tpu_custom_call.1} parent=1 // pred_region
      %s78 = ssub.s32 2048, 2048
      %79 = vsyncadd [#allocation12], %s78
      %s80 = sshll.u32 [#allocation11], 4
      %s81 = int_to_ptr.vmem [resolvable:$true] %s80
      %86 = dma.hbm_to_vmem [thread:$0]  %s5, 2048, %s81, [#allocation12], 64, 64, 4
    $region25: #{tpu_custom_call.1} parent=1 // pred_fallthru
      _
    // Predicated region
    $region26: #{tpu_custom_call.1} parent=1 // pred_check
      _
    $region27: #{tpu_custom_call.1} parent=1 // pred_check_branch
      %88 = sbr.rel (0) target = $region29
    $region28: #{tpu_custom_call.1} parent=1 // pred_region
      _
    $region29: #{tpu_custom_call.1} parent=1 // pred_fallthru
      _
    // Predicated region
    $region30: #{tpu_custom_call.1} parent=1 // pred_check
      _
    $region31: #{tpu_custom_call.1} parent=1 // pred_check_branch
      %90 = sbr.rel (0) target = $region33
    $region32: #{tpu_custom_call.1} parent=1 // pred_region
      %91 = dma.done [#allocation3], 64
    $region33: #{tpu_custom_call.1} parent=1 // pred_fallthru
      _
    // Predicated region
    $region34: #{tpu_custom_call.1} parent=1 // pred_check
      _
    $region35: #{tpu_custom_call.1} parent=1 // pred_check_branch
      %93 = sbr.rel (0) target = $region37
    $region36: #{tpu_custom_call.1} parent=1 // pred_region
      %94 = dma.done [#allocation6], 1024
    $region37: #{tpu_custom_call.1} parent=1 // pred_fallthru
      _
    // Predicated region
    $region38: #{tpu_custom_call.1} parent=1 // pred_check
      _
    $region39: #{tpu_custom_call.1} parent=1 // pred_check_branch
      %96 = sbr.rel (0) target = $region41
    $region40: #{tpu_custom_call.1} parent=1 // pred_region
      %97 = dma.done [#allocation6], 4096
    $region41: #{tpu_custom_call.1} parent=1 // pred_fallthru
      _
    // Predicated region
    $region42: #{tpu_custom_call.1} parent=1 // pred_check
      _
    $region43: #{tpu_custom_call.1} parent=1 // pred_check_branch
      %99 = sbr.rel (0) target = $region45
    $region44: #{tpu_custom_call.1} parent=1 // pred_region
      %100 = dma.done [#allocation9], 4096
    $region45: #{tpu_custom_call.1} parent=1 // pred_fallthru
      _
    // Predicated region
    $region46: #{tpu_custom_call.1} parent=1 // pred_check
      _
    $region47: #{tpu_custom_call.1} parent=1 // pred_check_branch
      %102 = sbr.rel (0) target = $region49
    $region48: #{tpu_custom_call.1} parent=1 // pred_region
      %103 = dma.done [#allocation9], 4096
    $region49: #{tpu_custom_call.1} parent=1 // pred_fallthru
      _
    // Predicated region
    $region50: #{tpu_custom_call.1} parent=1 // pred_check
      _
    $region51: #{tpu_custom_call.1} parent=1 // pred_check_branch
      %105 = sbr.rel (0) target = $region53
    $region52: #{tpu_custom_call.1} parent=1 // pred_region
      %106 = dma.done [#allocation12], 2048
    $region53: #{tpu_custom_call.1} parent=1 // pred_fallthru
      _
    %v108 = vld [vmem:[#allocation2] sm:$0xf]
    %v109 = vld [vmem:[#allocation5] sm:$0xff]
    %v110 = vld [vmem:[#allocation5 + $0x8] sm:$0xff]
    %v111 = vld [vmem:[#allocation5 + $0x10] sm:$0xff]
    %v112 = vld [vmem:[#allocation5 + $0x18] sm:$0xff]
    %v113 = vld [vmem:[#allocation5 + $0x20] sm:$0xff]
    %v114 = vld [vmem:[#allocation5 + $0x28] sm:$0xff]
    %v115 = vld [vmem:[#allocation5 + $0x30] sm:$0xff]
    %v116 = vld [vmem:[#allocation5 + $0x38] sm:$0xff]
    %v117 = vld [vmem:[%s6] ss:$8 sm:$0x3]
    %v119 = vlaneseq
    %v120 = vshrl.u32 %v119, 7
    %v121 = vsub.s32 0, %v120
    %v122 = vrot.slane %v117, %v121
    %v123 = vlaneseq
    %v124 = vshrl.u32 %v123, 7
    %v125 = vsub.s32 1, %v124
    %v126 = vrot.slane %v117, %v125
    %v137 = vunpack.c.l.b16 %v109
    %v138 = vunpack.c.h.b16 %v109
    %v139 = vunpack.c.l.b16 %v110
    %v140 = vunpack.c.h.b16 %v110
    %v141 = vunpack.c.l.b16 %v111
    %v142 = vunpack.c.h.b16 %v111
    %v143 = vunpack.c.l.b16 %v112
    %v144 = vunpack.c.h.b16 %v112
    %v145 = vunpack.c.l.b16 %v113
    %v146 = vunpack.c.h.b16 %v113
    %v147 = vunpack.c.l.b16 %v114
    %v148 = vunpack.c.h.b16 %v114
    %v149 = vunpack.c.l.b16 %v115
    %v150 = vunpack.c.h.b16 %v115
    %v151 = vunpack.c.l.b16 %v116
    %v152 = vunpack.c.h.b16 %v116
    %v153 = vpack.c.b16 %v139, %v137
    %v154 = vpack.c.b16 %v140, %v138
    %v155 = vpack.c.b16 %v143, %v141
    %v156 = vpack.c.b16 %v144, %v142
    %v157 = vpack.c.b16 %v147, %v145
    %v158 = vpack.c.b16 %v148, %v146
    %v159 = vpack.c.b16 %v151, %v149
    %v160 = vpack.c.b16 %v152, %v150
    %vm169 = vcmask 523264
    %v171 = vsel %vm169, %v108, 0
    %173 = vmatprep.subr.bf16.mxu0 %v154
    %174 = vmatpush1.bf16.msra.mxu0 %v153
    %175 = vmatprep.subr.bf16.mxu0 %v156
    %176 = vmatpush1.bf16.msra.mxu0 %v155
    %177 = vmatprep.subr.bf16.mxu0 %v158
    %178 = vmatpush1.bf16.msra.mxu0 %v157
    %179 = vmatprep.subr.bf16.mxu0 %v160
    %180 = vmatpush1.bf16.msra.mxu0 %v159
    %181 = vmatprep.subr.bf16.mxu0 0
    %182 = vmatpush1.bf16.msra.mxu0 0
    %183 = vmatprep.subr.bf16.mxu0 0
    %184 = vmatpush1.bf16.msra.mxu0 0
    %185 = vmatprep.subr.bf16.mxu0 0
    %186 = vmatpush1.bf16.msra.mxu0 0
    %187 = vmatprep.subr.bf16.mxu0 0
    %188 = vmatpush1.bf16.msra.mxu0 0
    %189 = vmatprep.subr.bf16.mxu0 0
    %190 = vmatpush1.bf16.msra.mxu0 0
    %191 = vmatprep.subr.bf16.mxu0 0
    %192 = vmatpush1.bf16.msra.mxu0 0
    %193 = vmatprep.subr.bf16.mxu0 0
    %194 = vmatpush1.bf16.msra.mxu0 0
    %195 = vmatprep.subr.bf16.mxu0 0
    %196 = vmatpush1.bf16.msra.mxu0 0
    %197 = vmatprep.subr.bf16.mxu0 0
    %198 = vmatpush1.bf16.msra.mxu0 0
    %199 = vmatprep.subr.bf16.mxu0 0
    %200 = vmatpush1.bf16.msra.mxu0 0
    %201 = vmatprep.subr.bf16.mxu0 0
    %202 = vmatpush1.bf16.msra.mxu0 0
    %203 = vmatprep.subr.bf16.mxu0 0
    %204 = vmatpush1.bf16.msra.mxu0 0
    %205 = vmatprep.mubr.bf16.mxu0 0
    %206 = vmatmul.mubr.bf16.gmra.mrb[0].mxu0 %v171
    %v207 = vpop.f32.mrb[0].mxu0
    %v208 = vadd.f32 %v122, %v207
    %v209 = vpop.f32.mrb[0].mxu0
    %v210 = vadd.f32 %v126, %v209
    %v211 = vpop.f32.mrb[0].mxu0
    %v212 = vpop.f32.mrb[0].mxu0
    %213 = vdwg.mxu0
    %vm214 = vcmp.gt.f32.partialorder %v208, 0.0
    %vm215 = vcmp.gt.f32.partialorder %v210, 0.0
    %v216 = vmul.f32 %v208, 0.2
    %v217 = vmul.f32 %v210, 0.2
    %v218 = vsel %vm214, %v208, %v216
    %v219 = vsel %vm215, %v210, %v217
    %v220 = vpack.c.bf16 %v218, %v218
    %v221 = vpack.c.bf16 %v219, %v219
    %v222 = vld [vmem:[#allocation7] sm:$0xff]
    %v223 = vld [vmem:[#allocation7 + $0x8] sm:$0xff]
    %v224 = vld [vmem:[#allocation7 + $0x10] sm:$0xff]
    %v225 = vld [vmem:[#allocation7 + $0x18] sm:$0xff]
    %v226 = vld [vmem:[#allocation7 + $0x20] sm:$0xff]
    %v227 = vld [vmem:[#allocation7 + $0x28] sm:$0xff]
    %v228 = vld [vmem:[#allocation7 + $0x30] sm:$0xff]
    %v229 = vld [vmem:[#allocation7 + $0x38] sm:$0xff]
    %v230 = vld [vmem:[#allocation7 + $0x40] sm:$0xff]
    %v231 = vld [vmem:[#allocation7 + $0x48] sm:$0xff]
    %v232 = vld [vmem:[#allocation7 + $0x50] sm:$0xff]
    %v233 = vld [vmem:[#allocation7 + $0x58] sm:$0xff]
    %v234 = vld [vmem:[#allocation7 + $0x60] sm:$0xff]
    %v235 = vld [vmem:[#allocation7 + $0x68] sm:$0xff]
    %v236 = vld [vmem:[#allocation7 + $0x70] sm:$0xff]
    %v237 = vld [vmem:[#allocation7 + $0x78] sm:$0xff]
    %v238 = vld [vmem:[#allocation7 + $0x80] sm:$0xff]
    %v239 = vld [vmem:[#allocation7 + $0x88] sm:$0xff]
    %v240 = vld [vmem:[#allocation7 + $0x90] sm:$0xff]
    %v241 = vld [vmem:[#allocation7 + $0x98] sm:$0xff]
    %v242 = vld [vmem:[#allocation7 + $0xa0] sm:$0xff]
    %v243 = vld [vmem:[#allocation7 + $0xa8] sm:$0xff]
    %v244 = vld [vmem:[#allocation7 + $0xb0] sm:$0xff]
    %v245 = vld [vmem:[#allocation7 + $0xb8] sm:$0xff]
    %v246 = vld [vmem:[#allocation7 + $0xc0] sm:$0xff]
    %v247 = vld [vmem:[#allocation7 + $0xc8] sm:$0xff]
    %v248 = vld [vmem:[#allocation7 + $0xd0] sm:$0xff]
    %v249 = vld [vmem:[#allocation7 + $0xd8] sm:$0xff]
    %v250 = vld [vmem:[#allocation7 + $0xe0] sm:$0xff]
    %v251 = vld [vmem:[#allocation7 + $0xe8] sm:$0xff]
    %v252 = vld [vmem:[#allocation7 + $0xf0] sm:$0xff]
    %v253 = vld [vmem:[#allocation7 + $0xf8] sm:$0xff]
    %s254 = scalar_lea.vmem %s6, 1
    %v255 = vld [vmem:[%s254] ss:$8 sm:$0x3]
    %v257 = vlaneseq
    %v258 = vshrl.u32 %v257, 7
    %v259 = vsub.s32 0, %v258
    %v260 = vrot.slane %v255, %v259
    %v261 = vlaneseq
    %v262 = vshrl.u32 %v261, 7
    %v263 = vsub.s32 1, %v262
    %v264 = vrot.slane %v255, %v263
    %v299 = vunpack.c.l.b16 %v222
    %v300 = vunpack.c.h.b16 %v222
    %v301 = vunpack.c.l.b16 %v223
    %v302 = vunpack.c.h.b16 %v223
    %v303 = vunpack.c.l.b16 %v224
    %v304 = vunpack.c.h.b16 %v224
    %v305 = vunpack.c.l.b16 %v225
    %v306 = vunpack.c.h.b16 %v225
    %v307 = vunpack.c.l.b16 %v226
    %v308 = vunpack.c.h.b16 %v226
    %v309 = vunpack.c.l.b16 %v227
    %v310 = vunpack.c.h.b16 %v227
    %v311 = vunpack.c.l.b16 %v228
    %v312 = vunpack.c.h.b16 %v228
    %v313 = vunpack.c.l.b16 %v229
    %v314 = vunpack.c.h.b16 %v229
    %v315 = vunpack.c.l.b16 %v230
    %v316 = vunpack.c.h.b16 %v230
    %v317 = vunpack.c.l.b16 %v231
    %v318 = vunpack.c.h.b16 %v231
    %v319 = vunpack.c.l.b16 %v232
    %v320 = vunpack.c.h.b16 %v232
    %v321 = vunpack.c.l.b16 %v233
    %v322 = vunpack.c.h.b16 %v233
    %v323 = vunpack.c.l.b16 %v234
    %v324 = vunpack.c.h.b16 %v234
    %v325 = vunpack.c.l.b16 %v235
    %v326 = vunpack.c.h.b16 %v235
    %v327 = vunpack.c.l.b16 %v236
    %v328 = vunpack.c.h.b16 %v236
    %v329 = vunpack.c.l.b16 %v237
    %v330 = vunpack.c.h.b16 %v237
    %v331 = vunpack.c.l.b16 %v238
    %v332 = vunpack.c.h.b16 %v238
    %v333 = vunpack.c.l.b16 %v239
    %v334 = vunpack.c.h.b16 %v239
    %v335 = vunpack.c.l.b16 %v240
    %v336 = vunpack.c.h.b16 %v240
    %v337 = vunpack.c.l.b16 %v241
    %v338 = vunpack.c.h.b16 %v241
    %v339 = vunpack.c.l.b16 %v242
    %v340 = vunpack.c.h.b16 %v242
    %v341 = vunpack.c.l.b16 %v243
    %v342 = vunpack.c.h.b16 %v243
    %v343 = vunpack.c.l.b16 %v244
    %v344 = vunpack.c.h.b16 %v244
    %v345 = vunpack.c.l.b16 %v245
    %v346 = vunpack.c.h.b16 %v245
    %v347 = vunpack.c.l.b16 %v246
    %v348 = vunpack.c.h.b16 %v246
    %v349 = vunpack.c.l.b16 %v247
    %v350 = vunpack.c.h.b16 %v247
    %v351 = vunpack.c.l.b16 %v248
    %v352 = vunpack.c.h.b16 %v248
    %v353 = vunpack.c.l.b16 %v249
    %v354 = vunpack.c.h.b16 %v249
    %v355 = vunpack.c.l.b16 %v250
    %v356 = vunpack.c.h.b16 %v250
    %v357 = vunpack.c.l.b16 %v251
    %v358 = vunpack.c.h.b16 %v251
    %v359 = vunpack.c.l.b16 %v252
    %v360 = vunpack.c.h.b16 %v252
    %v361 = vunpack.c.l.b16 %v253
    %v362 = vunpack.c.h.b16 %v253
    %v363 = vpack.c.b16 %v301, %v299
    %v364 = vpack.c.b16 %v302, %v300
    %v365 = vpack.c.b16 %v305, %v303
    %v366 = vpack.c.b16 %v306, %v304
    %v367 = vpack.c.b16 %v309, %v307
    %v368 = vpack.c.b16 %v310, %v308
    %v369 = vpack.c.b16 %v313, %v311
    %v370 = vpack.c.b16 %v314, %v312
    %v371 = vpack.c.b16 %v317, %v315
    %v372 = vpack.c.b16 %v318, %v316
    %v373 = vpack.c.b16 %v321, %v319
    %v374 = vpack.c.b16 %v322, %v320
    %v375 = vpack.c.b16 %v325, %v323
    %v376 = vpack.c.b16 %v326, %v324
    %v377 = vpack.c.b16 %v329, %v327
    %v378 = vpack.c.b16 %v330, %v328
    %v379 = vpack.c.b16 %v333, %v331
    %v380 = vpack.c.b16 %v334, %v332
    %v381 = vpack.c.b16 %v337, %v335
    %v382 = vpack.c.b16 %v338, %v336
    %v383 = vpack.c.b16 %v341, %v339
    %v384 = vpack.c.b16 %v342, %v340
    %v385 = vpack.c.b16 %v345, %v343
    %v386 = vpack.c.b16 %v346, %v344
    %v387 = vpack.c.b16 %v349, %v347
    %v388 = vpack.c.b16 %v350, %v348
    %v389 = vpack.c.b16 %v353, %v351
    %v390 = vpack.c.b16 %v354, %v352
    %v391 = vpack.c.b16 %v357, %v355
    %v392 = vpack.c.b16 %v358, %v356
    %v393 = vpack.c.b16 %v361, %v359
    %v394 = vpack.c.b16 %v362, %v360
    %427 = vmatprep.subr.bf16.mxu0 %v364
    %428 = vmatpush1.bf16.msra.mxu0 %v363
    %429 = vmatprep.subr.bf16.mxu0 %v366
    %430 = vmatpush1.bf16.msra.mxu0 %v365
    %431 = vmatprep.subr.bf16.mxu0 %v368
    %432 = vmatpush1.bf16.msra.mxu0 %v367
    %433 = vmatprep.subr.bf16.mxu0 %v370
    %434 = vmatpush1.bf16.msra.mxu0 %v369
    %435 = vmatprep.subr.bf16.mxu0 %v372
    %436 = vmatpush1.bf16.msra.mxu0 %v371
    %437 = vmatprep.subr.bf16.mxu0 %v374
    %438 = vmatpush1.bf16.msra.mxu0 %v373
    %439 = vmatprep.subr.bf16.mxu0 %v376
    %440 = vmatpush1.bf16.msra.mxu0 %v375
    %441 = vmatprep.subr.bf16.mxu0 %v378
    %442 = vmatpush1.bf16.msra.mxu0 %v377
    %443 = vmatprep.subr.bf16.mxu0 %v380
    %444 = vmatpush1.bf16.msra.mxu0 %v379
    %445 = vmatprep.subr.bf16.mxu0 %v382
    %446 = vmatpush1.bf16.msra.mxu0 %v381
    %447 = vmatprep.subr.bf16.mxu0 %v384
    %448 = vmatpush1.bf16.msra.mxu0 %v383
    %449 = vmatprep.subr.bf16.mxu0 %v386
    %450 = vmatpush1.bf16.msra.mxu0 %v385
    %451 = vmatprep.subr.bf16.mxu0 %v388
    %452 = vmatpush1.bf16.msra.mxu0 %v387
    %453 = vmatprep.subr.bf16.mxu0 %v390
    %454 = vmatpush1.bf16.msra.mxu0 %v389
    %455 = vmatprep.subr.bf16.mxu0 %v392
    %456 = vmatpush1.bf16.msra.mxu0 %v391
    %457 = vmatprep.subr.bf16.mxu0 %v394
    %458 = vmatpush1.bf16.msra.mxu0 %v393
    %459 = vmatprep.mubr.bf16.mxu0 %v221
    %460 = vmatmul.mubr.bf16.gmra.mrb[0].mxu0 %v220
    %v461 = vpop.f32.mrb[0].mxu0
    %v462 = vadd.f32 %v260, %v461
    %v463 = vpop.f32.mrb[0].mxu0
    %v464 = vadd.f32 %v264, %v463
    %v465 = vpop.f32.mrb[0].mxu0
    %v466 = vpop.f32.mrb[0].mxu0
    %467 = vdwg.mxu0
    %vm468 = vcmp.gt.f32.partialorder %v462, 0.0
    %vm469 = vcmp.gt.f32.partialorder %v464, 0.0
    %v470 = vmul.f32 %v462, 0.2
    %v471 = vmul.f32 %v464, 0.2
    %v472 = vsel %vm468, %v462, %v470
    %v473 = vsel %vm469, %v464, %v471
    %v474 = vpack.c.bf16 %v472, %v472
    %v475 = vpack.c.bf16 %v473, %v473
    %v476 = vld [vmem:[#allocation8] sm:$0xff]
    %v477 = vld [vmem:[#allocation8 + $0x8] sm:$0xff]
    %v478 = vld [vmem:[#allocation8 + $0x10] sm:$0xff]
    %v479 = vld [vmem:[#allocation8 + $0x18] sm:$0xff]
    %v480 = vld [vmem:[#allocation8 + $0x20] sm:$0xff]
    %v481 = vld [vmem:[#allocation8 + $0x28] sm:$0xff]
    %v482 = vld [vmem:[#allocation8 + $0x30] sm:$0xff]
    %v483 = vld [vmem:[#allocation8 + $0x38] sm:$0xff]
    %v484 = vld [vmem:[#allocation8 + $0x40] sm:$0xff]
    %v485 = vld [vmem:[#allocation8 + $0x48] sm:$0xff]
    %v486 = vld [vmem:[#allocation8 + $0x50] sm:$0xff]
    %v487 = vld [vmem:[#allocation8 + $0x58] sm:$0xff]
    %v488 = vld [vmem:[#allocation8 + $0x60] sm:$0xff]
    %v489 = vld [vmem:[#allocation8 + $0x68] sm:$0xff]
    %v490 = vld [vmem:[#allocation8 + $0x70] sm:$0xff]
    %v491 = vld [vmem:[#allocation8 + $0x78] sm:$0xff]
    %v492 = vld [vmem:[#allocation8 + $0x80] sm:$0xff]
    %v493 = vld [vmem:[#allocation8 + $0x88] sm:$0xff]
    %v494 = vld [vmem:[#allocation8 + $0x90] sm:$0xff]
    %v495 = vld [vmem:[#allocation8 + $0x98] sm:$0xff]
    %v496 = vld [vmem:[#allocation8 + $0xa0] sm:$0xff]
    %v497 = vld [vmem:[#allocation8 + $0xa8] sm:$0xff]
    %v498 = vld [vmem:[#allocation8 + $0xb0] sm:$0xff]
    %v499 = vld [vmem:[#allocation8 + $0xb8] sm:$0xff]
    %v500 = vld [vmem:[#allocation8 + $0xc0] sm:$0xff]
    %v501 = vld [vmem:[#allocation8 + $0xc8] sm:$0xff]
    %v502 = vld [vmem:[#allocation8 + $0xd0] sm:$0xff]
    %v503 = vld [vmem:[#allocation8 + $0xd8] sm:$0xff]
    %v504 = vld [vmem:[#allocation8 + $0xe0] sm:$0xff]
    %v505 = vld [vmem:[#allocation8 + $0xe8] sm:$0xff]
    %v506 = vld [vmem:[#allocation8 + $0xf0] sm:$0xff]
    %v507 = vld [vmem:[#allocation8 + $0xf8] sm:$0xff]
    %s508 = scalar_lea.vmem %s6, 2
    %v509 = vld [vmem:[%s508] ss:$8 sm:$0x3]
    %v511 = vlaneseq
    %v512 = vshrl.u32 %v511, 7
    %v513 = vsub.s32 0, %v512
    %v514 = vrot.slane %v509, %v513
    %v515 = vlaneseq
    %v516 = vshrl.u32 %v515, 7
    %v517 = vsub.s32 1, %v516
    %v518 = vrot.slane %v509, %v517
    %v553 = vunpack.c.l.b16 %v476
    %v554 = vunpack.c.h.b16 %v476
    %v555 = vunpack.c.l.b16 %v477
    %v556 = vunpack.c.h.b16 %v477
    %v557 = vunpack.c.l.b16 %v478
    %v558 = vunpack.c.h.b16 %v478
    %v559 = vunpack.c.l.b16 %v479
    %v560 = vunpack.c.h.b16 %v479
    %v561 = vunpack.c.l.b16 %v480
    %v562 = vunpack.c.h.b16 %v480
    %v563 = vunpack.c.l.b16 %v481
    %v564 = vunpack.c.h.b16 %v481
    %v565 = vunpack.c.l.b16 %v482
    %v566 = vunpack.c.h.b16 %v482
    %v567 = vunpack.c.l.b16 %v483
    %v568 = vunpack.c.h.b16 %v483
    %v569 = vunpack.c.l.b16 %v484
    %v570 = vunpack.c.h.b16 %v484
    %v571 = vunpack.c.l.b16 %v485
    %v572 = vunpack.c.h.b16 %v485
    %v573 = vunpack.c.l.b16 %v486
    %v574 = vunpack.c.h.b16 %v486
    %v575 = vunpack.c.l.b16 %v487
    %v576 = vunpack.c.h.b16 %v487
    %v577 = vunpack.c.l.b16 %v488
    %v578 = vunpack.c.h.b16 %v488
    %v579 = vunpack.c.l.b16 %v489
    %v580 = vunpack.c.h.b16 %v489
    %v581 = vunpack.c.l.b16 %v490
    %v582 = vunpack.c.h.b16 %v490
    %v583 = vunpack.c.l.b16 %v491
    %v584 = vunpack.c.h.b16 %v491
    %v585 = vunpack.c.l.b16 %v492
    %v586 = vunpack.c.h.b16 %v492
    %v587 = vunpack.c.l.b16 %v493
    %v588 = vunpack.c.h.b16 %v493
    %v589 = vunpack.c.l.b16 %v494
    %v590 = vunpack.c.h.b16 %v494
    %v591 = vunpack.c.l.b16 %v495
    %v592 = vunpack.c.h.b16 %v495
    %v593 = vunpack.c.l.b16 %v496
    %v594 = vunpack.c.h.b16 %v496
    %v595 = vunpack.c.l.b16 %v497
    %v596 = vunpack.c.h.b16 %v497
    %v597 = vunpack.c.l.b16 %v498
    %v598 = vunpack.c.h.b16 %v498
    %v599 = vunpack.c.l.b16 %v499
    %v600 = vunpack.c.h.b16 %v499
    %v601 = vunpack.c.l.b16 %v500
    %v602 = vunpack.c.h.b16 %v500
    %v603 = vunpack.c.l.b16 %v501
    %v604 = vunpack.c.h.b16 %v501
    %v605 = vunpack.c.l.b16 %v502
    %v606 = vunpack.c.h.b16 %v502
    %v607 = vunpack.c.l.b16 %v503
    %v608 = vunpack.c.h.b16 %v503
    %v609 = vunpack.c.l.b16 %v504
    %v610 = vunpack.c.h.b16 %v504
    %v611 = vunpack.c.l.b16 %v505
    %v612 = vunpack.c.h.b16 %v505
    %v613 = vunpack.c.l.b16 %v506
    %v614 = vunpack.c.h.b16 %v506
    %v615 = vunpack.c.l.b16 %v507
    %v616 = vunpack.c.h.b16 %v507
    %v617 = vpack.c.b16 %v555, %v553
    %v618 = vpack.c.b16 %v556, %v554
    %v619 = vpack.c.b16 %v559, %v557
    %v620 = vpack.c.b16 %v560, %v558
    %v621 = vpack.c.b16 %v563, %v561
    %v622 = vpack.c.b16 %v564, %v562
    %v623 = vpack.c.b16 %v567, %v565
    %v624 = vpack.c.b16 %v568, %v566
    %v625 = vpack.c.b16 %v571, %v569
    %v626 = vpack.c.b16 %v572, %v570
    %v627 = vpack.c.b16 %v575, %v573
    %v628 = vpack.c.b16 %v576, %v574
    %v629 = vpack.c.b16 %v579, %v577
    %v630 = vpack.c.b16 %v580, %v578
    %v631 = vpack.c.b16 %v583, %v581
    %v632 = vpack.c.b16 %v584, %v582
    %v633 = vpack.c.b16 %v587, %v585
    %v634 = vpack.c.b16 %v588, %v586
    %v635 = vpack.c.b16 %v591, %v589
    %v636 = vpack.c.b16 %v592, %v590
    %v637 = vpack.c.b16 %v595, %v593
    %v638 = vpack.c.b16 %v596, %v594
    %v639 = vpack.c.b16 %v599, %v597
    %v640 = vpack.c.b16 %v600, %v598
    %v641 = vpack.c.b16 %v603, %v601
    %v642 = vpack.c.b16 %v604, %v602
    %v643 = vpack.c.b16 %v607, %v605
    %v644 = vpack.c.b16 %v608, %v606
    %v645 = vpack.c.b16 %v611, %v609
    %v646 = vpack.c.b16 %v612, %v610
    %v647 = vpack.c.b16 %v615, %v613
    %v648 = vpack.c.b16 %v616, %v614
    %681 = vmatprep.subr.bf16.mxu0 %v618
    %682 = vmatpush1.bf16.msra.mxu0 %v617
    %683 = vmatprep.subr.bf16.mxu0 %v620
    %684 = vmatpush1.bf16.msra.mxu0 %v619
    %685 = vmatprep.subr.bf16.mxu0 %v622
    %686 = vmatpush1.bf16.msra.mxu0 %v621
    %687 = vmatprep.subr.bf16.mxu0 %v624
    %688 = vmatpush1.bf16.msra.mxu0 %v623
    %689 = vmatprep.subr.bf16.mxu0 %v626
    %690 = vmatpush1.bf16.msra.mxu0 %v625
    %691 = vmatprep.subr.bf16.mxu0 %v628
    %692 = vmatpush1.bf16.msra.mxu0 %v627
    %693 = vmatprep.subr.bf16.mxu0 %v630
    %694 = vmatpush1.bf16.msra.mxu0 %v629
    %695 = vmatprep.subr.bf16.mxu0 %v632
    %696 = vmatpush1.bf16.msra.mxu0 %v631
    %697 = vmatprep.subr.bf16.mxu0 %v634
    %698 = vmatpush1.bf16.msra.mxu0 %v633
    %699 = vmatprep.subr.bf16.mxu0 %v636
    %700 = vmatpush1.bf16.msra.mxu0 %v635
    %701 = vmatprep.subr.bf16.mxu0 %v638
    %702 = vmatpush1.bf16.msra.mxu0 %v637
    %703 = vmatprep.subr.bf16.mxu0 %v640
    %704 = vmatpush1.bf16.msra.mxu0 %v639
    %705 = vmatprep.subr.bf16.mxu0 %v642
    %706 = vmatpush1.bf16.msra.mxu0 %v641
    %707 = vmatprep.subr.bf16.mxu0 %v644
    %708 = vmatpush1.bf16.msra.mxu0 %v643
    %709 = vmatprep.subr.bf16.mxu0 %v646
    %710 = vmatpush1.bf16.msra.mxu0 %v645
    %711 = vmatprep.subr.bf16.mxu0 %v648
    %712 = vmatpush1.bf16.msra.mxu0 %v647
    %713 = vmatprep.mubr.bf16.mxu0 %v475
    %714 = vmatmul.mubr.bf16.gmra.mrb[0].mxu0 %v474
    %v715 = vpop.f32.mrb[0].mxu0
    %v716 = vadd.f32 %v514, %v715
    %v717 = vpop.f32.mrb[0].mxu0
    %v718 = vadd.f32 %v518, %v717
    %v719 = vpop.f32.mrb[0].mxu0
    %v720 = vpop.f32.mrb[0].mxu0
    %721 = vdwg.mxu0
    %vm722 = vcmp.gt.f32.partialorder %v716, 0.0
    %vm723 = vcmp.gt.f32.partialorder %v718, 0.0
    %v724 = vmul.f32 %v716, 0.2
    %v725 = vmul.f32 %v718, 0.2
    %v726 = vsel %vm722, %v716, %v724
    %v727 = vsel %vm723, %v718, %v725
    %v728 = vpack.c.bf16 %v726, %v726
    %v729 = vpack.c.bf16 %v727, %v727
    %v730 = vld [vmem:[#allocation10] sm:$0xff]
    %v731 = vld [vmem:[#allocation10 + $0x8] sm:$0xff]
    %v732 = vld [vmem:[#allocation10 + $0x10] sm:$0xff]
    %v733 = vld [vmem:[#allocation10 + $0x18] sm:$0xff]
    %v734 = vld [vmem:[#allocation10 + $0x20] sm:$0xff]
    %v735 = vld [vmem:[#allocation10 + $0x28] sm:$0xff]
    %v736 = vld [vmem:[#allocation10 + $0x30] sm:$0xff]
    %v737 = vld [vmem:[#allocation10 + $0x38] sm:$0xff]
    %v738 = vld [vmem:[#allocation10 + $0x40] sm:$0xff]
    %v739 = vld [vmem:[#allocation10 + $0x48] sm:$0xff]
    %v740 = vld [vmem:[#allocation10 + $0x50] sm:$0xff]
    %v741 = vld [vmem:[#allocation10 + $0x58] sm:$0xff]
    %v742 = vld [vmem:[#allocation10 + $0x60] sm:$0xff]
    %v743 = vld [vmem:[#allocation10 + $0x68] sm:$0xff]
    %v744 = vld [vmem:[#allocation10 + $0x70] sm:$0xff]
    %v745 = vld [vmem:[#allocation10 + $0x78] sm:$0xff]
    %v746 = vld [vmem:[#allocation10 + $0x80] sm:$0xff]
    %v747 = vld [vmem:[#allocation10 + $0x88] sm:$0xff]
    %v748 = vld [vmem:[#allocation10 + $0x90] sm:$0xff]
    %v749 = vld [vmem:[#allocation10 + $0x98] sm:$0xff]
    %v750 = vld [vmem:[#allocation10 + $0xa0] sm:$0xff]
    %v751 = vld [vmem:[#allocation10 + $0xa8] sm:$0xff]
    %v752 = vld [vmem:[#allocation10 + $0xb0] sm:$0xff]
    %v753 = vld [vmem:[#allocation10 + $0xb8] sm:$0xff]
    %v754 = vld [vmem:[#allocation10 + $0xc0] sm:$0xff]
    %v755 = vld [vmem:[#allocation10 + $0xc8] sm:$0xff]
    %v756 = vld [vmem:[#allocation10 + $0xd0] sm:$0xff]
    %v757 = vld [vmem:[#allocation10 + $0xd8] sm:$0xff]
    %v758 = vld [vmem:[#allocation10 + $0xe0] sm:$0xff]
    %v759 = vld [vmem:[#allocation10 + $0xe8] sm:$0xff]
    %v760 = vld [vmem:[#allocation10 + $0xf0] sm:$0xff]
    %v761 = vld [vmem:[#allocation10 + $0xf8] sm:$0xff]
    %s762 = scalar_lea.vmem %s6, 3
    %v763 = vld [vmem:[%s762] ss:$8 sm:$0x3]
    %v765 = vlaneseq
    %v766 = vshrl.u32 %v765, 7
    %v767 = vsub.s32 0, %v766
    %v768 = vrot.slane %v763, %v767
    %v769 = vlaneseq
    %v770 = vshrl.u32 %v769, 7
    %v771 = vsub.s32 1, %v770
    %v772 = vrot.slane %v763, %v771
    %v807 = vunpack.c.l.b16 %v730
    %v808 = vunpack.c.h.b16 %v730
    %v809 = vunpack.c.l.b16 %v731
    %v810 = vunpack.c.h.b16 %v731
    %v811 = vunpack.c.l.b16 %v732
    %v812 = vunpack.c.h.b16 %v732
    %v813 = vunpack.c.l.b16 %v733
    %v814 = vunpack.c.h.b16 %v733
    %v815 = vunpack.c.l.b16 %v734
    %v816 = vunpack.c.h.b16 %v734
    %v817 = vunpack.c.l.b16 %v735
    %v818 = vunpack.c.h.b16 %v735
    %v819 = vunpack.c.l.b16 %v736
    %v820 = vunpack.c.h.b16 %v736
    %v821 = vunpack.c.l.b16 %v737
    %v822 = vunpack.c.h.b16 %v737
    %v823 = vunpack.c.l.b16 %v738
    %v824 = vunpack.c.h.b16 %v738
    %v825 = vunpack.c.l.b16 %v739
    %v826 = vunpack.c.h.b16 %v739
    %v827 = vunpack.c.l.b16 %v740
    %v828 = vunpack.c.h.b16 %v740
    %v829 = vunpack.c.l.b16 %v741
    %v830 = vunpack.c.h.b16 %v741
    %v831 = vunpack.c.l.b16 %v742
    %v832 = vunpack.c.h.b16 %v742
    %v833 = vunpack.c.l.b16 %v743
    %v834 = vunpack.c.h.b16 %v743
    %v835 = vunpack.c.l.b16 %v744
    %v836 = vunpack.c.h.b16 %v744
    %v837 = vunpack.c.l.b16 %v745
    %v838 = vunpack.c.h.b16 %v745
    %v839 = vunpack.c.l.b16 %v746
    %v840 = vunpack.c.h.b16 %v746
    %v841 = vunpack.c.l.b16 %v747
    %v842 = vunpack.c.h.b16 %v747
    %v843 = vunpack.c.l.b16 %v748
    %v844 = vunpack.c.h.b16 %v748
    %v845 = vunpack.c.l.b16 %v749
    %v846 = vunpack.c.h.b16 %v749
    %v847 = vunpack.c.l.b16 %v750
    %v848 = vunpack.c.h.b16 %v750
    %v849 = vunpack.c.l.b16 %v751
    %v850 = vunpack.c.h.b16 %v751
    %v851 = vunpack.c.l.b16 %v752
    %v852 = vunpack.c.h.b16 %v752
    %v853 = vunpack.c.l.b16 %v753
    %v854 = vunpack.c.h.b16 %v753
    %v855 = vunpack.c.l.b16 %v754
    %v856 = vunpack.c.h.b16 %v754
    %v857 = vunpack.c.l.b16 %v755
    %v858 = vunpack.c.h.b16 %v755
    %v859 = vunpack.c.l.b16 %v756
    %v860 = vunpack.c.h.b16 %v756
    %v861 = vunpack.c.l.b16 %v757
    %v862 = vunpack.c.h.b16 %v757
    %v863 = vunpack.c.l.b16 %v758
    %v864 = vunpack.c.h.b16 %v758
    %v865 = vunpack.c.l.b16 %v759
    %v866 = vunpack.c.h.b16 %v759
    %v867 = vunpack.c.l.b16 %v760
    %v868 = vunpack.c.h.b16 %v760
    %v869 = vunpack.c.l.b16 %v761
    %v870 = vunpack.c.h.b16 %v761
    %v871 = vpack.c.b16 %v809, %v807
    %v872 = vpack.c.b16 %v810, %v808
    %v873 = vpack.c.b16 %v813, %v811
    %v874 = vpack.c.b16 %v814, %v812
    %v875 = vpack.c.b16 %v817, %v815
    %v876 = vpack.c.b16 %v818, %v816
    %v877 = vpack.c.b16 %v821, %v819
    %v878 = vpack.c.b16 %v822, %v820
    %v879 = vpack.c.b16 %v825, %v823
    %v880 = vpack.c.b16 %v826, %v824
    %v881 = vpack.c.b16 %v829, %v827
    %v882 = vpack.c.b16 %v830, %v828
    %v883 = vpack.c.b16 %v833, %v831
    %v884 = vpack.c.b16 %v834, %v832
    %v885 = vpack.c.b16 %v837, %v835
    %v886 = vpack.c.b16 %v838, %v836
    %v887 = vpack.c.b16 %v841, %v839
    %v888 = vpack.c.b16 %v842, %v840
    %v889 = vpack.c.b16 %v845, %v843
    %v890 = vpack.c.b16 %v846, %v844
    %v891 = vpack.c.b16 %v849, %v847
    %v892 = vpack.c.b16 %v850, %v848
    %v893 = vpack.c.b16 %v853, %v851
    %v894 = vpack.c.b16 %v854, %v852
    %v895 = vpack.c.b16 %v857, %v855
    %v896 = vpack.c.b16 %v858, %v856
    %v897 = vpack.c.b16 %v861, %v859
    %v898 = vpack.c.b16 %v862, %v860
    %v899 = vpack.c.b16 %v865, %v863
    %v900 = vpack.c.b16 %v866, %v864
    %v901 = vpack.c.b16 %v869, %v867
    %v902 = vpack.c.b16 %v870, %v868
    %935 = vmatprep.subr.bf16.mxu0 %v872
    %936 = vmatpush1.bf16.msra.mxu0 %v871
    %937 = vmatprep.subr.bf16.mxu0 %v874
    %938 = vmatpush1.bf16.msra.mxu0 %v873
    %939 = vmatprep.subr.bf16.mxu0 %v876
    %940 = vmatpush1.bf16.msra.mxu0 %v875
    %941 = vmatprep.subr.bf16.mxu0 %v878
    %942 = vmatpush1.bf16.msra.mxu0 %v877
    %943 = vmatprep.subr.bf16.mxu0 %v880
    %944 = vmatpush1.bf16.msra.mxu0 %v879
    %945 = vmatprep.subr.bf16.mxu0 %v882
    %946 = vmatpush1.bf16.msra.mxu0 %v881
    %947 = vmatprep.subr.bf16.mxu0 %v884
    %948 = vmatpush1.bf16.msra.mxu0 %v883
    %949 = vmatprep.subr.bf16.mxu0 %v886
    %950 = vmatpush1.bf16.msra.mxu0 %v885
    %951 = vmatprep.subr.bf16.mxu0 %v888
    %952 = vmatpush1.bf16.msra.mxu0 %v887
    %953 = vmatprep.subr.bf16.mxu0 %v890
    %954 = vmatpush1.bf16.msra.mxu0 %v889
    %955 = vmatprep.subr.bf16.mxu0 %v892
    %956 = vmatpush1.bf16.msra.mxu0 %v891
    %957 = vmatprep.subr.bf16.mxu0 %v894
    %958 = vmatpush1.bf16.msra.mxu0 %v893
    %959 = vmatprep.subr.bf16.mxu0 %v896
    %960 = vmatpush1.bf16.msra.mxu0 %v895
    %961 = vmatprep.subr.bf16.mxu0 %v898
    %962 = vmatpush1.bf16.msra.mxu0 %v897
    %963 = vmatprep.subr.bf16.mxu0 %v900
    %964 = vmatpush1.bf16.msra.mxu0 %v899
    %965 = vmatprep.subr.bf16.mxu0 %v902
    %966 = vmatpush1.bf16.msra.mxu0 %v901
    %967 = vmatprep.mubr.bf16.mxu0 %v729
    %968 = vmatmul.mubr.bf16.gmra.mrb[0].mxu0 %v728
    %v969 = vpop.f32.mrb[0].mxu0
    %v970 = vadd.f32 %v768, %v969
    %v971 = vpop.f32.mrb[0].mxu0
    %v972 = vadd.f32 %v772, %v971
    %v973 = vpop.f32.mrb[0].mxu0
    %v974 = vpop.f32.mrb[0].mxu0
    %975 = vdwg.mxu0
    %vm976 = vcmp.gt.f32.partialorder %v970, 0.0
    %vm977 = vcmp.gt.f32.partialorder %v972, 0.0
    %v978 = vmul.f32 %v970, 0.2
    %v979 = vmul.f32 %v972, 0.2
    %v980 = vsel %vm976, %v970, %v978
    %v981 = vsel %vm977, %v972, %v979
    %v982 = vpack.c.bf16 %v980, %v980
    %v983 = vpack.c.bf16 %v981, %v981
    %v984 = vld [vmem:[#allocation11] sm:$0xf]
    %v985 = vld [vmem:[#allocation11 + $0x4] sm:$0xf]
    %v986 = vld [vmem:[#allocation11 + $0x8] sm:$0xf]
    %v987 = vld [vmem:[#allocation11 + $0xc] sm:$0xf]
    %v988 = vld [vmem:[#allocation11 + $0x10] sm:$0xf]
    %v989 = vld [vmem:[#allocation11 + $0x14] sm:$0xf]
    %v990 = vld [vmem:[#allocation11 + $0x18] sm:$0xf]
    %v991 = vld [vmem:[#allocation11 + $0x1c] sm:$0xf]
    %v992 = vld [vmem:[#allocation11 + $0x20] sm:$0xf]
    %v993 = vld [vmem:[#allocation11 + $0x24] sm:$0xf]
    %v994 = vld [vmem:[#allocation11 + $0x28] sm:$0xf]
    %v995 = vld [vmem:[#allocation11 + $0x2c] sm:$0xf]
    %v996 = vld [vmem:[#allocation11 + $0x30] sm:$0xf]
    %v997 = vld [vmem:[#allocation11 + $0x34] sm:$0xf]
    %v998 = vld [vmem:[#allocation11 + $0x38] sm:$0xf]
    %v999 = vld [vmem:[#allocation11 + $0x3c] sm:$0xf]
    %v1000 = vld [vmem:[#allocation11 + $0x40] sm:$0xf]
    %v1001 = vld [vmem:[#allocation11 + $0x44] sm:$0xf]
    %v1002 = vld [vmem:[#allocation11 + $0x48] sm:$0xf]
    %v1003 = vld [vmem:[#allocation11 + $0x4c] sm:$0xf]
    %v1004 = vld [vmem:[#allocation11 + $0x50] sm:$0xf]
    %v1005 = vld [vmem:[#allocation11 + $0x54] sm:$0xf]
    %v1006 = vld [vmem:[#allocation11 + $0x58] sm:$0xf]
    %v1007 = vld [vmem:[#allocation11 + $0x5c] sm:$0xf]
    %v1008 = vld [vmem:[#allocation11 + $0x60] sm:$0xf]
    %v1009 = vld [vmem:[#allocation11 + $0x64] sm:$0xf]
    %v1010 = vld [vmem:[#allocation11 + $0x68] sm:$0xf]
    %v1011 = vld [vmem:[#allocation11 + $0x6c] sm:$0xf]
    %v1012 = vld [vmem:[#allocation11 + $0x70] sm:$0xf]
    %v1013 = vld [vmem:[#allocation11 + $0x74] sm:$0xf]
    %v1014 = vld [vmem:[#allocation11 + $0x78] sm:$0xf]
    %v1015 = vld [vmem:[#allocation11 + $0x7c] sm:$0xf]
    %v1016 = vld [vmem:[%s6 + $0x4] ss:$0 sm:$0xff]
    %v1049 = vunpack.c.l.b16 %v984
    %v1050 = vunpack.c.l.b16 %v985
    %v1051 = vunpack.c.l.b16 %v986
    %v1052 = vunpack.c.l.b16 %v987
    %v1053 = vunpack.c.l.b16 %v988
    %v1054 = vunpack.c.l.b16 %v989
    %v1055 = vunpack.c.l.b16 %v990
    %v1056 = vunpack.c.l.b16 %v991
    %v1057 = vunpack.c.l.b16 %v992
    %v1058 = vunpack.c.l.b16 %v993
    %v1059 = vunpack.c.l.b16 %v994
    %v1060 = vunpack.c.l.b16 %v995
    %v1061 = vunpack.c.l.b16 %v996
    %v1062 = vunpack.c.l.b16 %v997
    %v1063 = vunpack.c.l.b16 %v998
    %v1064 = vunpack.c.l.b16 %v999
    %v1065 = vunpack.c.l.b16 %v1000
    %v1066 = vunpack.c.l.b16 %v1001
    %v1067 = vunpack.c.l.b16 %v1002
    %v1068 = vunpack.c.l.b16 %v1003
    %v1069 = vunpack.c.l.b16 %v1004
    %v1070 = vunpack.c.l.b16 %v1005
    %v1071 = vunpack.c.l.b16 %v1006
    %v1072 = vunpack.c.l.b16 %v1007
    %v1073 = vunpack.c.l.b16 %v1008
    %v1074 = vunpack.c.l.b16 %v1009
    %v1075 = vunpack.c.l.b16 %v1010
    %v1076 = vunpack.c.l.b16 %v1011
    %v1077 = vunpack.c.l.b16 %v1012
    %v1078 = vunpack.c.l.b16 %v1013
    %v1079 = vunpack.c.l.b16 %v1014
    %v1080 = vunpack.c.l.b16 %v1015
    %v1081 = vpack.c.b16 %v1050, %v1049
    %v1082 = vpack.c.b16 %v1052, %v1051
    %v1083 = vpack.c.b16 %v1054, %v1053
    %v1084 = vpack.c.b16 %v1056, %v1055
    %v1085 = vpack.c.b16 %v1058, %v1057
    %v1086 = vpack.c.b16 %v1060, %v1059
    %v1087 = vpack.c.b16 %v1062, %v1061
    %v1088 = vpack.c.b16 %v1064, %v1063
    %v1089 = vpack.c.b16 %v1066, %v1065
    %v1090 = vpack.c.b16 %v1068, %v1067
    %v1091 = vpack.c.b16 %v1070, %v1069
    %v1092 = vpack.c.b16 %v1072, %v1071
    %v1093 = vpack.c.b16 %v1074, %v1073
    %v1094 = vpack.c.b16 %v1076, %v1075
    %v1095 = vpack.c.b16 %v1078, %v1077
    %v1096 = vpack.c.b16 %v1080, %v1079
    %1113 = vmatprep.subr.bf16.mxu0 0
    %1114 = vmatpush1.bf16.msra.mxu0 %v1081
    %1115 = vmatprep.subr.bf16.mxu0 0
    %1116 = vmatpush1.bf16.msra.mxu0 %v1082
    %1117 = vmatprep.subr.bf16.mxu0 0
    %1118 = vmatpush1.bf16.msra.mxu0 %v1083
    %1119 = vmatprep.subr.bf16.mxu0 0
    %1120 = vmatpush1.bf16.msra.mxu0 %v1084
    %1121 = vmatprep.subr.bf16.mxu0 0
    %1122 = vmatpush1.bf16.msra.mxu0 %v1085
    %1123 = vmatprep.subr.bf16.mxu0 0
    %1124 = vmatpush1.bf16.msra.mxu0 %v1086
    %1125 = vmatprep.subr.bf16.mxu0 0
    %1126 = vmatpush1.bf16.msra.mxu0 %v1087
    %1127 = vmatprep.subr.bf16.mxu0 0
    %1128 = vmatpush1.bf16.msra.mxu0 %v1088
    %1129 = vmatprep.subr.bf16.mxu0 0
    %1130 = vmatpush1.bf16.msra.mxu0 %v1089
    %1131 = vmatprep.subr.bf16.mxu0 0
    %1132 = vmatpush1.bf16.msra.mxu0 %v1090
    %1133 = vmatprep.subr.bf16.mxu0 0
    %1134 = vmatpush1.bf16.msra.mxu0 %v1091
    %1135 = vmatprep.subr.bf16.mxu0 0
    %1136 = vmatpush1.bf16.msra.mxu0 %v1092
    %1137 = vmatprep.subr.bf16.mxu0 0
    %1138 = vmatpush1.bf16.msra.mxu0 %v1093
    %1139 = vmatprep.subr.bf16.mxu0 0
    %1140 = vmatpush1.bf16.msra.mxu0 %v1094
    %1141 = vmatprep.subr.bf16.mxu0 0
    %1142 = vmatpush1.bf16.msra.mxu0 %v1095
    %1143 = vmatprep.subr.bf16.mxu0 0
    %1144 = vmatpush1.bf16.msra.mxu0 %v1096
    %1145 = vmatprep.mubr.bf16.mxu0 %v983
    %1146 = vmatmul.mubr.bf16.gmra.mrb[0].mxu0 %v982
    %v1147 = vpop.f32.mrb[0].mxu0
    %v1148 = vadd.f32 %v1016, %v1147
    %v1149 = vpop.f32.mrb[0].mxu0
    %v1150 = vpop.f32.mrb[0].mxu0
    %v1151 = vpop.f32.mrb[0].mxu0
    %1152 = vdwg.mxu0
    %1153 = vst [vmem:[#allocation13] sm:$0xff] %v1148
    // Predicated region
    $region54: #{tpu_custom_call.1} parent=1 // pred_check
      _
    $region55: #{tpu_custom_call.1} parent=1 // pred_check_branch
      %1155 = sbr.rel (0) target = $region57
    $region56: #{tpu_custom_call.1} parent=1 // pred_region
      %s1157 = ssub.s32 128, 128
      %1158 = vsyncadd [#allocation4], %s1157
      %s1160 = sshll.u32 [#allocation13], 4
      %s1161 = int_to_ptr.vmem [resolvable:$true] %s1160
      %1163 = dma.vmem_to_hbm [thread:$0]  %s1161, 128, %s7, [#allocation4]
    $region57: #{tpu_custom_call.1} parent=1 // pred_fallthru
      _
    // Predicated region
    $region58: #{tpu_custom_call.1} parent=1 // pred_check
      _
    $region59: #{tpu_custom_call.1} parent=1 // pred_check_branch
      %1165 = sbr.rel (0) target = $region61
    $region60: #{tpu_custom_call.1} parent=1 // pred_region
      %1166 = dma.done [#allocation4], 128
    $region61: #{tpu_custom_call.1} parent=1 // pred_fallthru
      _
    %1167 = vsyncpa [#allocation3], 1
    %1168 = vsyncpa [#allocation6], 1
    %1169 = vsyncpa [#allocation9], 1
    %1170 = vsyncpa [#allocation12], 1
    %1171 = vsyncpa [#allocation4], 1

</llo_original>
